<compile_context>
chip_gen: v5e
topology: v5e:2x2
jax: 0.10.0
libtpu: 0.0.40
codegen_flags: <defaults>
</compile_context>

<pallas_src>
import functools
import jax
import jax.numpy as jnp
from jax.experimental import pallas as pl
from jax.experimental.pallas import tpu as pltpu

# ------------------------- config (small synthetic shapes) -------------------------
B = 2            # batch
S = 8            # sequence length
VOCAB = 50
H = 32           # hidden size
NH = 2           # attention heads
DH = H // NH     # head dim
INTER = 64       # FFN intermediate
L = 2            # encoder layers
MOL_DIM = 34     # mol feature dim (concat dim = 1 + 34 ~ "mol_f_dim")
PROJ_IN = 1 + MOL_DIM
PROJ_DIM = 64    # stand-in for 1024
OUT_DIM = 1
LN_EPS = 1e-5
SELU_ALPHA = 1.6732632423543772848170429916717
SELU_SCALE = 1.0507009873554804934193349852946
ATTN_SCALE = 1.0 / (DH ** 0.5)


# ------------------------- in-kernel helpers -------------------------
def _mxu(a, b):
    """bf16-operand matmul with f32 accumulation (MXU)."""
    return jnp.dot(a.astype(jnp.bfloat16), b.astype(jnp.bfloat16),
                   preferred_element_type=jnp.float32)


def _mxu_nt(a, b):
    """a @ b.T with bf16 operands / f32 accumulation (contraction on last dims)."""
    return jax.lax.dot_general(
        a.astype(jnp.bfloat16), b.astype(jnp.bfloat16),
        (((1,), (1,)), ((), ())), preferred_element_type=jnp.float32)


def _ln(x, g, b):
    mu = jnp.mean(x, axis=-1, keepdims=True)
    var = jnp.mean(jnp.square(x - mu), axis=-1, keepdims=True)
    return (x - mu) * jax.lax.rsqrt(var + LN_EPS) * g + b


# ------------------------- Pallas kernels -------------------------
def _emb_ln_kernel(x_ref, g_ref, b_ref, o_ref):
    # LayerNorm only — no fake zero residual.
    o_ref[...] = _ln(x_ref[...], g_ref[...], b_ref[...])


def _encoder_layer_kernel(h_ref, m_ref,
                          wqkv_ref, bqkv_ref, wo_ref, bo_ref, g1_ref, be1_ref,
                          w1_ref, bf1_ref, w2_ref, bf2_ref, g2_ref, be2_ref,
                          o_ref):
    # One grid step = one batch element (S rows of hidden state), fully VMEM-resident.
    x = h_ref[...]                                          # (S, H) f32
    mask = m_ref[0]                                         # (1, S) additive bias, f32

    # Fused QKV projection: one matmul into (S, 3H).
    qkv = _mxu(x, wqkv_ref[...]) + bqkv_ref[...]            # (S, 3H) f32

    # Per-head attention; O-projection accumulated per head (no concat needed).
    wo = wo_ref[...]                                        # (H, H) bf16
    attn = bo_ref[...]                                      # (1, H) -> broadcasts to (S, H)
    for hh in range(NH):
        qh = qkv[:, hh * DH:(hh + 1) * DH]                  # (S, DH)
        kh = qkv[:, H + hh * DH:H + (hh + 1) * DH]          # (S, DH)
        vh = qkv[:, 2 * H + hh * DH:2 * H + (hh + 1) * DH]  # (S, DH)
        s = _mxu_nt(qh, kh) * ATTN_SCALE + mask             # (S, S), mask added in f32
        s = s - jnp.max(s, axis=-1, keepdims=True)
        p = jnp.exp(s)
        p = p * pl.reciprocal(jnp.sum(p, axis=-1, keepdims=True), approx=True)
        ctx = _mxu(p, vh)                                   # (S, DH)
        attn = attn + _mxu(ctx, wo[hh * DH:(hh + 1) * DH, :])

    # residual + LN (fused epilogue)
    h1 = _ln(attn + x, g1_ref[...], be1_ref[...])

    # FFN with fused GELU and fused residual + LN epilogue
    ff = jax.nn.gelu(_mxu(h1, w1_ref[...]) + bf1_ref[...])
    ff = _mxu(ff, w2_ref[...]) + bf2_ref[...]
    o_ref[...] = _ln(ff + h1, g2_ref[...], be2_ref[...])


def _head_kernel(cls_ref, mol_ref,
                 wd_ref, bd_ref, wco_ref, bco_ref,
                 wp0_ref, wpm_ref, bp_ref, g_ref, be_ref, wout_ref, bout_ref,
                 o_ref):
    # Fused: cls dense -> tanh -> out_proj -> [implicit concat] -> projection -> LN -> SELU -> out
    x = cls_ref[...]                                                        # (B, H)
    h1 = jnp.tanh(_mxu(x, wd_ref[...]) + bd_ref[...])                       # (B, H)
    logit = jnp.dot(h1, wco_ref[...],
                    preferred_element_type=jnp.float32) + bco_ref[...]      # (B, 1)

    # projection of cat([logit, mol_f], dim=1) without materializing the concat:
    #   cat @ Wp = logit * Wp[0:1, :] + mol_f @ Wp[1:, :]
    proj = (logit * wp0_ref[...]
            + _mxu(mol_ref[...], wpm_ref[...])
            + bp_ref[...])                                                  # (B, PROJ_DIM)
    proj = _ln(proj, g_ref[...], be_ref[...])
    proj = SELU_SCALE * jnp.where(
        proj > 0.0, proj, SELU_ALPHA * (jnp.exp(jnp.minimum(proj, 0.0)) - 1.0))
    o_ref[...] = jnp.dot(proj, wout_ref[...],
                         preferred_element_type=jnp.float32) + bout_ref[...]  # (B, 1)


# ------------------------- pallas_call wrappers -------------------------
def _full_spec(shape):
    nd = len(shape)
    return pl.BlockSpec(shape, lambda *_: (0,) * nd)


def _w_spec(shape):
    nd = len(shape)
    return pl.BlockSpec(shape, lambda i, _n=nd: (0,) * _n)


def embedding_layernorm(x, g, b):
    # x: (B*S, H)
    return pl.pallas_call(
        _emb_ln_kernel,
        grid=(B,),
        in_specs=[pl.BlockSpec((S, H), lambda i: (i, 0)),
                  _w_spec((1, H)), _w_spec((1, H))],
        out_specs=pl.BlockSpec((S, H), lambda i: (i, 0)),
        out_shape=jax.ShapeDtypeStruct((B * S, H), jnp.float32),
        compiler_params=pltpu.CompilerParams(dimension_semantics=("parallel",)),
    )(x, g, b)


def encoder_layer(h, mask3, lp):
    # h: (B*S, H) f32, mask3: (B, 1, S) additive bias
    in_specs = [
        pl.BlockSpec((S, H), lambda i: (i, 0)),          # hidden rows of this batch
        pl.BlockSpec((1, 1, S), lambda i: (i, 0, 0)),    # mask bias of this batch
        _w_spec((H, 3 * H)), _w_spec((1, 3 * H)),        # fused QKV
        _w_spec((H, H)), _w_spec((1, H)),                # O proj
        _w_spec((1, H)), _w_spec((1, H)),                # attn LN
        _w_spec((H, INTER)), _w_spec((1, INTER)),        # FFN1
        _w_spec((INTER, H)), _w_spec((1, H)),            # FFN2
        _w_spec((1, H)), _w_spec((1, H)),                # FFN LN
    ]
    return pl.pallas_call(
        _encoder_layer_kernel,
        grid=(B,),
        in_specs=in_specs,
        out_specs=pl.BlockSpec((S, H), lambda i: (i, 0)),
        out_shape=jax.ShapeDtypeStruct((B * S, H), jnp.float32),
        compiler_params=pltpu.CompilerParams(dimension_semantics=("parallel",)),
    )(h, mask3,
      lp["wqkv"], lp["bqkv"], lp["wo"], lp["bo"], lp["ln1_g"], lp["ln1_b"],
      lp["w1"], lp["b1"], lp["w2"], lp["b2"], lp["ln2_g"], lp["ln2_b"])


def fused_head(cls_tok, mol_f, hp):
    args = (cls_tok, mol_f,
            hp["wd"], hp["bd"], hp["wco"], hp["bco"],
            hp["wp0"], hp["wpm"], hp["bp"], hp["g"], hp["beta"],
            hp["wout"], hp["bout"])
    return pl.pallas_call(
        _head_kernel,
        grid=(1,),
        in_specs=[_full_spec(a.shape) for a in args],
        out_specs=_full_spec((B, OUT_DIM)),
        out_shape=jax.ShapeDtypeStruct((B, OUT_DIM), jnp.float32),
    )(*args)


# ------------------------- parameters -------------------------
def init_params(key):
    ks = iter(jax.random.split(key, 128))

    def w(shape, dtype=jnp.bfloat16):
        # matmul weights stored bf16 (MXU operands); tiny N=1 weights stay f32
        return (jax.random.normal(next(ks), shape, jnp.float32) * 0.02).astype(dtype)

    def zeros(shape):
        return jnp.zeros(shape, jnp.float32)

    def ones(shape):
        return jnp.ones(shape, jnp.float32)

    params = {
        "word_emb": w((VOCAB, H), jnp.float32),
        "pos_emb": w((S, H), jnp.float32),
        "emb_ln_g": ones((1, H)), "emb_ln_b": zeros((1, H)),
        "layers": [],
        "head": {
            # RoBERTa classification head
            "wd": w((H, H)), "bd": zeros((1, H)),
            "wco": w((H, 1), jnp.float32), "bco": zeros((1, 1)),
            # ChemBERT projection weight (PROJ_IN, PROJ_DIM) split so the concat
            # [enc_logits, mol_f] never materializes:
            "wp0": w((1, PROJ_DIM), jnp.float32),     # row for the encoder logit
            "wpm": w((MOL_DIM, PROJ_DIM)),            # rows for mol_f
            "bp": zeros((1, PROJ_DIM)),
            "g": ones((1, PROJ_DIM)), "beta": zeros((1, PROJ_DIM)),
            "wout": w((PROJ_DIM, OUT_DIM), jnp.float32), "bout": zeros((1, OUT_DIM)),
        },
    }
    for _ in range(L):
        params["layers"].append({
            "wqkv": w((H, 3 * H)), "bqkv": zeros((1, 3 * H)),   # fused Q/K/V
            "wo": w((H, H)), "bo": zeros((1, H)),
            "ln1_g": ones((1, H)), "ln1_b": zeros((1, H)),
            "w1": w((H, INTER)), "b1": zeros((1, INTER)),
            "w2": w((INTER, H)), "b2": zeros((1, H)),
            "ln2_g": ones((1, H)), "ln2_b": zeros((1, H)),
        })
    return params


# ------------------------- forward pass -------------------------
def chembert_forward(params, input_ids, attention_mask, mol_f):
    # --- embeddings (gather is XLA glue; LN is a Pallas kernel) ---
    pos_ids = jnp.arange(S, dtype=jnp.int32)
    emb = params["word_emb"][input_ids] + params["pos_emb"][pos_ids][None, :, :]  # (B,S,H)
    h = embedding_layernorm(emb.reshape(B * S, H),
                            params["emb_ln_g"], params["emb_ln_b"])

    # additive attention-mask bias (B, 1, S): 0 where attend, -1e9 where masked (f32)
    mask3 = ((1.0 - attention_mask.astype(jnp.float32)) * -1e9)[:, None, :]

    # --- encoder: one fused Pallas megakernel per layer ---
    for lp in params["layers"]:
        h = encoder_layer(h, mask3, lp)

    # --- heads: CLS token -> fused (dense, tanh, out_proj, projection, LN, SELU, out) ---
    cls_tok = h.reshape(B, S, H)[:, 0, :]                  # (B, H) tiny XLA slice
    out = fused_head(cls_tok, mol_f, params["head"])       # (B, 1)
    logits = jnp.squeeze(out, axis=-1)                     # (B,)
    return {"logits": logits}


# ------------------------- main -------------------------
if __name__ == "__main__":
    key = jax.random.PRNGKey(0)
    k_param, k_ids, k_mol = jax.random.split(key, 3)

    params = init_params(k_param)
    input_ids = jax.random.randint(k_ids, (B, S), 0, VOCAB, dtype=jnp.int32)
    attention_mask = jnp.ones((B, S), jnp.int32).at[1, S - 2:].set(0)  # mask tail of sample 1
    mol_f = jax.random.normal(k_mol, (B, MOL_DIM), jnp.float32)

    fwd = jax.jit(functools.partial(chembert_forward, params))
    out = fwd(input_ids, attention_mask, mol_f)
    jax.block_until_ready(out["logits"])
    assert out["logits"].shape == (B,) and out["logits"].dtype == jnp.float32
    print("KERNEL_OK")
</pallas_src>

<mosaic_0001>
module attributes {stable_mosaic.version = 11 : i64} {
  func.func @_emb_ln_kernel(%arg0: i32, %arg1: memref<8x32xf32, #tpu.memory_space<vmem>>, %arg2: memref<1x32xf32, #tpu.memory_space<vmem>>, %arg3: memref<1x32xf32, #tpu.memory_space<vmem>>, %arg4: memref<8x32xf32, #tpu.memory_space<vmem>>) attributes {dimension_semantics = [#tpu.dimension_semantics<parallel>], iteration_bounds = array<i64: 2>, scalar_prefetch = 0 : i64, scratch_operands = 0 : i64, tpu.core_type = #tpu.core_type<tc>, window_params = [{transform_indices = @transform_0, window_bounds = array<i64: 8, 32>}, {pipeline_mode = #tpu.pipeline_mode<synchronous>, transform_indices = @transform_1, window_bounds = array<i64: 1, 32>}, {pipeline_mode = #tpu.pipeline_mode<synchronous>, transform_indices = @transform_2, window_bounds = array<i64: 1, 32>}, {transform_indices = @transform_3, window_bounds = array<i64: 8, 32>}]} {
    %c0 = arith.constant 0 : index
    %c0_0 = arith.constant 0 : index
    %0 = vector.load %arg1[%c0, %c0_0] : memref<8x32xf32, #tpu.memory_space<vmem>>, vector<8x32xf32>
    %c0_1 = arith.constant 0 : index
    %c0_2 = arith.constant 0 : index
    %1 = vector.load %arg2[%c0_1, %c0_2] : memref<1x32xf32, #tpu.memory_space<vmem>>, vector<1x32xf32>
    %c0_3 = arith.constant 0 : index
    %c0_4 = arith.constant 0 : index
    %2 = vector.load %arg3[%c0_3, %c0_4] : memref<1x32xf32, #tpu.memory_space<vmem>>, vector<1x32xf32>
    %cst = arith.constant dense<0.000000e+00> : vector<8xf32>
    %3 = vector.multi_reduction <add>, %0, %cst [1] : vector<8x32xf32> to vector<8xf32>
    %4 = vector.shape_cast %3 : vector<8xf32> to vector<8x1xf32>
    %cst_5 = arith.constant 3.200000e+01 : f32
    %5 = vector.broadcast %cst_5 : f32 to vector<8x1xf32>
    %6 = arith.divf %4, %5 : vector<8x1xf32>
    %7 = vector.broadcast %6 : vector<8x1xf32> to vector<8x32xf32>
    %8 = arith.subf %0, %7 : vector<8x32xf32>
    %9 = arith.mulf %8, %8 : vector<8x32xf32>
    %cst_6 = arith.constant dense<0.000000e+00> : vector<8xf32>
    %10 = vector.multi_reduction <add>, %9, %cst_6 [1] : vector<8x32xf32> to vector<8xf32>
    %11 = vector.shape_cast %10 : vector<8xf32> to vector<8x1xf32>
    %cst_7 = arith.constant 3.200000e+01 : f32
    %12 = vector.broadcast %cst_7 : f32 to vector<8x1xf32>
    %13 = arith.divf %11, %12 : vector<8x1xf32>
    %14 = vector.broadcast %6 : vector<8x1xf32> to vector<8x32xf32>
    %15 = arith.subf %0, %14 : vector<8x32xf32>
    %cst_8 = arith.constant 9.99999974E-6 : f32
    %16 = vector.broadcast %cst_8 : f32 to vector<8x1xf32>
    %17 = arith.addf %13, %16 : vector<8x1xf32>
    %18 = math.rsqrt %17 : vector<8x1xf32>
    %19 = vector.broadcast %18 : vector<8x1xf32> to vector<8x32xf32>
    %20 = arith.mulf %15, %19 : vector<8x32xf32>
    %21 = vector.broadcast %1 : vector<1x32xf32> to vector<8x32xf32>
    %22 = arith.mulf %20, %21 : vector<8x32xf32>
    %23 = vector.broadcast %2 : vector<1x32xf32> to vector<8x32xf32>
    %24 = arith.addf %22, %23 : vector<8x32xf32>
    %c0_9 = arith.constant 0 : index
    %c0_10 = arith.constant 0 : index
    %25 = vector.load %arg4[%c0_9, %c0_10] : memref<8x32xf32, #tpu.memory_space<vmem>>, vector<8x32xf32>
    tpu.vector_store %arg4[%c0_9, %c0_10], %24 {strides = array<i32>} : memref<8x32xf32, #tpu.memory_space<vmem>>, vector<8x32xf32>,
    return
  }
  func.func @transform_0(%arg0: i32) -> (i32, i32) {
    %c0_i32 = arith.constant 0 : i32
    %c0_i32_0 = arith.constant 0 : i32
    return %arg0, %c0_i32 : i32, i32
  }
  func.func @transform_1(%arg0: i32) -> (i32, i32) {
    %c0_i32 = arith.constant 0 : i32
    %c0_i32_0 = arith.constant 0 : i32
    %c0_i32_1 = arith.constant 0 : i32
    return %c0_i32, %c0_i32_0 : i32, i32
  }
  func.func @transform_2(%arg0: i32) -> (i32, i32) {
    %c0_i32 = arith.constant 0 : i32
    %c0_i32_0 = arith.constant 0 : i32
    %c0_i32_1 = arith.constant 0 : i32
    return %c0_i32, %c0_i32_0 : i32, i32
  }
  func.func @transform_3(%arg0: i32) -> (i32, i32) {
    %c0_i32 = arith.constant 0 : i32
    %c0_i32_0 = arith.constant 0 : i32
    return %arg0, %c0_i32 : i32, i32
  }
}

module attributes {stable_mosaic.version = 11 : i64} {
  func.func @_head_kernel(%arg0: i32, %arg1: memref<2x32xf32, #tpu.memory_space<vmem>>, %arg2: memref<2x34xf32, #tpu.memory_space<vmem>>, %arg3: memref<32x32xbf16, #tpu.memory_space<vmem>>, %arg4: memref<1x32xf32, #tpu.memory_space<vmem>>, %arg5: memref<32x1xf32, #tpu.memory_space<vmem>>, %arg6: memref<1x1xf32, #tpu.memory_space<vmem>>, %arg7: memref<1x64xf32, #tpu.memory_space<vmem>>, %arg8: memref<34x64xbf16, #tpu.memory_space<vmem>>, %arg9: memref<1x64xf32, #tpu.memory_space<vmem>>, %arg10: memref<1x64xf32, #tpu.memory_space<vmem>>, %arg11: memref<1x64xf32, #tpu.memory_space<vmem>>, %arg12: memref<64x1xf32, #tpu.memory_space<vmem>>, %arg13: memref<1x1xf32, #tpu.memory_space<vmem>>, %arg14: memref<2x1xf32, #tpu.memory_space<vmem>>) attributes {dimension_semantics = [#tpu.dimension_semantics<arbitrary>], iteration_bounds = array<i64: 1>, scalar_prefetch = 0 : i64, scratch_operands = 0 : i64, tpu.core_type = #tpu.core_type<tc>, window_params = [{pipeline_mode = #tpu.pipeline_mode<synchronous>, transform_indices = @transform_0, window_bounds = array<i64: 2, 32>}, {pipeline_mode = #tpu.pipeline_mode<synchronous>, transform_indices = @transform_1, window_bounds = array<i64: 2, 34>}, {pipeline_mode = #tpu.pipeline_mode<synchronous>, transform_indices = @transform_2, window_bounds = array<i64: 32, 32>}, {pipeline_mode = #tpu.pipeline_mode<synchronous>, transform_indices = @transform_3, window_bounds = array<i64: 1, 32>}, {pipeline_mode = #tpu.pipeline_mode<synchronous>, transform_indices = @transform_4, window_bounds = array<i64: 32, 1>}, {pipeline_mode = #tpu.pipeline_mode<synchronous>, transform_indices = @transform_5, window_bounds = array<i64: 1, 1>}, {pipeline_mode = #tpu.pipeline_mode<synchronous>, transform_indices = @transform_6, window_bounds = array<i64: 1, 64>}, {pipeline_mode = #tpu.pipeline_mode<synchronous>, transform_indices = @transform_7, window_bounds = array<i64: 34, 64>}, {pipeline_mode = #tpu.pipeline_mode<synchronous>, transform_indices = @transform_8, window_bounds = array<i64: 1, 64>}, {pipeline_mode = #tpu.pipeline_mode<synchronous>, transform_indices = @transform_9, window_bounds = array<i64: 1, 64>}, {pipeline_mode = #tpu.pipeline_mode<synchronous>, transform_indices = @transform_10, window_bounds = array<i64: 1, 64>}, {pipeline_mode = #tpu.pipeline_mode<synchronous>, transform_indices = @transform_11, window_bounds = array<i64: 64, 1>}, {pipeline_mode = #tpu.pipeline_mode<synchronous>, transform_indices = @transform_12, window_bounds = array<i64: 1, 1>}, {pipeline_mode = #tpu.pipeline_mode<synchronous>, transform_indices = @transform_13, window_bounds = array<i64: 2, 1>}]} {
    %c0 = arith.constant 0 : index
    %c0_0 = arith.constant 0 : index
    %0 = vector.load %arg1[%c0, %c0_0] : memref<2x32xf32, #tpu.memory_space<vmem>>, vector<2x32xf32>
    %c0_1 = arith.constant 0 : index
    %c0_2 = arith.constant 0 : index
    %1 = vector.load %arg3[%c0_1, %c0_2] : memref<32x32xbf16, #tpu.memory_space<vmem>>, vector<32x32xbf16>
    %2 = arith.truncf %0 : vector<2x32xf32> to vector<2x32xbf16>
    %cst = arith.constant dense<0.000000e+00> : vector<2x32xf32>
    %3 = tpu.matmul %2, %1, %cst {dimension_numbers = #tpu.dot_dimension_numbers<[1], [0], [0], [1], [0, 0, 1, 1], [], []>} : vector<2x32xbf16>, vector<32x32xbf16>, vector<2x32xf32> -> vector<2x32xf32>
    %c0_3 = arith.constant 0 : index
    %c0_4 = arith.constant 0 : index
    %4 = vector.load %arg4[%c0_3, %c0_4] : memref<1x32xf32, #tpu.memory_space<vmem>>, vector<1x32xf32>
    %5 = vector.broadcast %4 : vector<1x32xf32> to vector<2x32xf32>
    %6 = arith.addf %3, %5 : vector<2x32xf32>
    %7 = math.tanh %6 : vector<2x32xf32>
    %c0_5 = arith.constant 0 : index
    %c0_6 = arith.constant 0 : index
    %8 = vector.load %arg5[%c0_5, %c0_6] : memref<32x1xf32, #tpu.memory_space<vmem>>, vector<32x1xf32>
    %cst_7 = arith.constant dense<0.000000e+00> : vector<2x1xf32>
    %9 = tpu.matmul %7, %8, %cst_7 {dimension_numbers = #tpu.dot_dimension_numbers<[1], [0], [0], [1], [0, 0, 1, 1], [], []>} : vector<2x32xf32>, vector<32x1xf32>, vector<2x1xf32> -> vector<2x1xf32>
    %c0_8 = arith.constant 0 : index
    %c0_9 = arith.constant 0 : index
    %10 = vector.load %arg6[%c0_8, %c0_9] : memref<1x1xf32, #tpu.memory_space<vmem>>, vector<1x1xf32>
    %11 = vector.broadcast %10 : vector<1x1xf32> to vector<2x1xf32>
    %12 = arith.addf %9, %11 : vector<2x1xf32>
    %c0_10 = arith.constant 0 : index
    %c0_11 = arith.constant 0 : index
    %13 = vector.load %arg7[%c0_10, %c0_11] : memref<1x64xf32, #tpu.memory_space<vmem>>, vector<1x64xf32>
    %14 = vector.broadcast %12 : vector<2x1xf32> to vector<2x64xf32>
    %15 = vector.broadcast %13 : vector<1x64xf32> to vector<2x64xf32>
    %16 = arith.mulf %14, %15 : vector<2x64xf32>
    %c0_12 = arith.constant 0 : index
    %c0_13 = arith.constant 0 : index
    %17 = vector.load %arg2[%c0_12, %c0_13] : memref<2x34xf32, #tpu.memory_space<vmem>>, vector<2x34xf32>
    %c0_14 = arith.constant 0 : index
    %c0_15 = arith.constant 0 : index
    %18 = vector.load %arg8[%c0_14, %c0_15] : memref<34x64xbf16, #tpu.memory_space<vmem>>, vector<34x64xbf16>
    %19 = arith.truncf %17 : vector<2x34xf32> to vector<2x34xbf16>
    %cst_16 = arith.constant dense<0.000000e+00> : vector<2x64xf32>
    %20 = tpu.matmul %19, %18, %cst_16 {dimension_numbers = #tpu.dot_dimension_numbers<[1], [0], [0], [1], [0, 0, 1, 1], [], []>} : vector<2x34xbf16>, vector<34x64xbf16>, vector<2x64xf32> -> vector<2x64xf32>
    %21 = arith.addf %16, %20 : vector<2x64xf32>
    %c0_17 = arith.constant 0 : index
    %c0_18 = arith.constant 0 : index
    %22 = vector.load %arg9[%c0_17, %c0_18] : memref<1x64xf32, #tpu.memory_space<vmem>>, vector<1x64xf32>
    %23 = vector.broadcast %22 : vector<1x64xf32> to vector<2x64xf32>
    %24 = arith.addf %21, %23 : vector<2x64xf32>
    %c0_19 = arith.constant 0 : index
    %c0_20 = arith.constant 0 : index
    %25 = vector.load %arg10[%c0_19, %c0_20] : memref<1x64xf32, #tpu.memory_space<vmem>>, vector<1x64xf32>
    %c0_21 = arith.constant 0 : index
    %c0_22 = arith.constant 0 : index
    %26 = vector.load %arg11[%c0_21, %c0_22] : memref<1x64xf32, #tpu.memory_space<vmem>>, vector<1x64xf32>
    %cst_23 = arith.constant dense<0.000000e+00> : vector<2xf32>
    %27 = vector.multi_reduction <add>, %24, %cst_23 [1] : vector<2x64xf32> to vector<2xf32>
    %28 = vector.shape_cast %27 : vector<2xf32> to vector<2x1xf32>
    %cst_24 = arith.constant 6.400000e+01 : f32
    %29 = vector.broadcast %cst_24 : f32 to vector<2x1xf32>
    %30 = arith.divf %28, %29 : vector<2x1xf32>
    %31 = vector.broadcast %30 : vector<2x1xf32> to vector<2x64xf32>
    %32 = arith.subf %24, %31 : vector<2x64xf32>
    %33 = arith.mulf %32, %32 : vector<2x64xf32>
    %cst_25 = arith.constant dense<0.000000e+00> : vector<2xf32>
    %34 = vector.multi_reduction <add>, %33, %cst_25 [1] : vector<2x64xf32> to vector<2xf32>
    %35 = vector.shape_cast %34 : vector<2xf32> to vector<2x1xf32>
    %cst_26 = arith.constant 6.400000e+01 : f32
    %36 = vector.broadcast %cst_26 : f32 to vector<2x1xf32>
    %37 = arith.divf %35, %36 : vector<2x1xf32>
    %38 = vector.broadcast %30 : vector<2x1xf32> to vector<2x64xf32>
    %39 = arith.subf %24, %38 : vector<2x64xf32>
    %cst_27 = arith.constant 9.99999974E-6 : f32
    %40 = vector.broadcast %cst_27 : f32 to vector<2x1xf32>
    %41 = arith.addf %37, %40 : vector<2x1xf32>
    %42 = math.rsqrt %41 : vector<2x1xf32>
    %43 = vector.broadcast %42 : vector<2x1xf32> to vector<2x64xf32>
    %44 = arith.mulf %39, %43 : vector<2x64xf32>
    %45 = vector.broadcast %25 : vector<1x64xf32> to vector<2x64xf32>
    %46 = arith.mulf %44, %45 : vector<2x64xf32>
    %47 = vector.broadcast %26 : vector<1x64xf32> to vector<2x64xf32>
    %48 = arith.addf %46, %47 : vector<2x64xf32>
    %cst_28 = arith.constant 0.000000e+00 : f32
    %49 = vector.broadcast %cst_28 : f32 to vector<2x64xf32>
    %50 = arith.cmpf ogt, %48, %49 : vector<2x64xf32>
    %cst_29 = arith.constant 0.000000e+00 : f32
    %51 = vector.broadcast %cst_29 : f32 to vector<2x64xf32>
    %52 = arith.minimumf %48, %51 : vector<2x64xf32>
    %53 = math.exp %52 : vector<2x64xf32>
    %cst_30 = arith.constant 1.000000e+00 : f32
    %54 = vector.broadcast %cst_30 : f32 to vector<2x64xf32>
    %55 = arith.subf %53, %54 : vector<2x64xf32>
    %cst_31 = arith.constant 1.67326319 : f32
    %56 = vector.broadcast %cst_31 : f32 to vector<2x64xf32>
    %57 = arith.mulf %56, %55 : vector<2x64xf32>
    %58 = arith.select %50, %48, %57 : vector<2x64xi1>, vector<2x64xf32>
    %cst_32 = arith.constant 1.05070102 : f32
    %59 = vector.broadcast %cst_32 : f32 to vector<2x64xf32>
    %60 = arith.mulf %59, %58 : vector<2x64xf32>
    %c0_33 = arith.constant 0 : index
    %c0_34 = arith.constant 0 : index
    %61 = vector.load %arg12[%c0_33, %c0_34] : memref<64x1xf32, #tpu.memory_space<vmem>>, vector<64x1xf32>
    %cst_35 = arith.constant dense<0.000000e+00> : vector<2x1xf32>
    %62 = tpu.matmul %60, %61, %cst_35 {dimension_numbers = #tpu.dot_dimension_numbers<[1], [0], [0], [1], [0, 0, 1, 1], [], []>} : vector<2x64xf32>, vector<64x1xf32>, vector<2x1xf32> -> vector<2x1xf32>
    %c0_36 = arith.constant 0 : index
    %c0_37 = arith.constant 0 : index
    %63 = vector.load %arg13[%c0_36, %c0_37] : memref<1x1xf32, #tpu.memory_space<vmem>>, vector<1x1xf32>
    %64 = vector.broadcast %63 : vector<1x1xf32> to vector<2x1xf32>
    %65 = arith.addf %62, %64 : vector<2x1xf32>
    %c0_38 = arith.constant 0 : index
    %c0_39 = arith.constant 0 : index
    %66 = vector.load %arg14[%c0_38, %c0_39] : memref<2x1xf32, #tpu.memory_space<vmem>>, vector<2x1xf32>
    tpu.vector_store %arg14[%c0_38, %c0_39], %65 {strides = array<i32>} : memref<2x1xf32, #tpu.memory_space<vmem>>, vector<2x1xf32>,
    return
  }
  func.func @transform_0(%arg0: i32) -> (i32, i32) {
    %c0_i32 = arith.constant 0 : i32
    %c0_i32_0 = arith.constant 0 : i32
    %c0_i32_1 = arith.constant 0 : i32
    return %c0_i32, %c0_i32_0 : i32, i32
  }
  func.func @transform_1(%arg0: i32) -> (i32, i32) {
    %c0_i32 = arith.constant 0 : i32
    %c0_i32_0 = arith.constant 0 : i32
    %c0_i32_1 = arith.constant 0 : i32
    return %c0_i32, %c0_i32_0 : i32, i32
  }
  func.func @transform_2(%arg0: i32) -> (i32, i32) {
    %c0_i32 = arith.constant 0 : i32
    %c0_i32_0 = arith.constant 0 : i32
    %c0_i32_1 = arith.constant 0 : i32
    return %c0_i32, %c0_i32_0 : i32, i32
  }
  func.func @transform_3(%arg0: i32) -> (i32, i32) {
    %c0_i32 = arith.constant 0 : i32
    %c0_i32_0 = arith.constant 0 : i32
    %c0_i32_1 = arith.constant 0 : i32
    return %c0_i32, %c0_i32_0 : i32, i32
  }
  func.func @transform_4(%arg0: i32) -> (i32, i32) {
    %c0_i32 = arith.constant 0 : i32
    %c0_i32_0 = arith.constant 0 : i32
    %c0_i32_1 = arith.constant 0 : i32
    return %c0_i32, %c0_i32_0 : i32, i32
  }
  func.func @transform_5(%arg0: i32) -> (i32, i32) {
    %c0_i32 = arith.constant 0 : i32
    %c0_i32_0 = arith.constant 0 : i32
    %c0_i32_1 = arith.constant 0 : i32
    return %c0_i32, %c0_i32_0 : i32, i32
  }
  func.func @transform_6(%arg0: i32) -> (i32, i32) {
    %c0_i32 = arith.constant 0 : i32
    %c0_i32_0 = arith.constant 0 : i32
    %c0_i32_1 = arith.constant 0 : i32
    return %c0_i32, %c0_i32_0 : i32, i32
  }
  func.func @transform_7(%arg0: i32) -> (i32, i32) {
    %c0_i32 = arith.constant 0 : i32
    %c0_i32_0 = arith.constant 0 : i32
    %c0_i32_1 = arith.constant 0 : i32
    return %c0_i32, %c0_i32_0 : i32, i32
  }
  func.func @transform_8(%arg0: i32) -> (i32, i32) {
    %c0_i32 = arith.constant 0 : i32
    %c0_i32_0 = arith.constant 0 : i32
    %c0_i32_1 = arith.constant 0 : i32
    return %c0_i32, %c0_i32_0 : i32, i32
  }
  func.func @transform_9(%arg0: i32) -> (i32, i32) {
    %c0_i32 = arith.constant 0 : i32
    %c0_i32_0 = arith.constant 0 : i32
    %c0_i32_1 = arith.constant 0 : i32
    return %c0_i32, %c0_i32_0 : i32, i32
  }
  func.func @transform_10(%arg0: i32) -> (i32, i32) {
    %c0_i32 = arith.constant 0 : i32
    %c0_i32_0 = arith.constant 0 : i32
    %c0_i32_1 = arith.constant 0 : i32
    return %c0_i32, %c0_i32_0 : i32, i32
  }
  func.func @transform_11(%arg0: i32) -> (i32, i32) {
    %c0_i32 = arith.constant 0 : i32
    %c0_i32_0 = arith.constant 0 : i32
    %c0_i32_1 = arith.constant 0 : i32
    return %c0_i32, %c0_i32_0 : i32, i32
  }
  func.func @transform_12(%arg0: i32) -> (i32, i32) {
    %c0_i32 = arith.constant 0 : i32
    %c0_i32_0 = arith.constant 0 : i32
    %c0_i32_1 = arith.constant 0 : i32
    return %c0_i32, %c0_i32_0 : i32, i32
  }
  func.func @transform_13(%arg0: i32) -> (i32, i32) {
    %c0_i32 = arith.constant 0 : i32
    %c0_i32_0 = arith.constant 0 : i32
    %c0_i32_1 = arith.constant 0 : i32
    return %c0_i32, %c0_i32_0 : i32, i32
  }
}

module attributes {stable_mosaic.version = 11 : i64} {
  func.func @_encoder_layer_kernel(%arg0: i32, %arg1: memref<8x32xf32, #tpu.memory_space<vmem>>, %arg2: memref<1x1x8xf32, #tpu.memory_space<vmem>>, %arg3: memref<32x96xbf16, #tpu.memory_space<vmem>>, %arg4: memref<1x96xf32, #tpu.memory_space<vmem>>, %arg5: memref<32x32xbf16, #tpu.memory_space<vmem>>, %arg6: memref<1x32xf32, #tpu.memory_space<vmem>>, %arg7: memref<1x32xf32, #tpu.memory_space<vmem>>, %arg8: memref<1x32xf32, #tpu.memory_space<vmem>>, %arg9: memref<32x64xbf16, #tpu.memory_space<vmem>>, %arg10: memref<1x64xf32, #tpu.memory_space<vmem>>, %arg11: memref<64x32xbf16, #tpu.memory_space<vmem>>, %arg12: memref<1x32xf32, #tpu.memory_space<vmem>>, %arg13: memref<1x32xf32, #tpu.memory_space<vmem>>, %arg14: memref<1x32xf32, #tpu.memory_space<vmem>>, %arg15: memref<8x32xf32, #tpu.memory_space<vmem>>) attributes {dimension_semantics = [#tpu.dimension_semantics<parallel>], iteration_bounds = array<i64: 2>, scalar_prefetch = 0 : i64, scratch_operands = 0 : i64, tpu.core_type = #tpu.core_type<tc>, window_params = [{transform_indices = @transform_0, window_bounds = array<i64: 8, 32>}, {transform_indices = @transform_1, window_bounds = array<i64: 1, 1, 8>}, {pipeline_mode = #tpu.pipeline_mode<synchronous>, transform_indices = @transform_2, window_bounds = array<i64: 32, 96>}, {pipeline_mode = #tpu.pipeline_mode<synchronous>, transform_indices = @transform_3, window_bounds = array<i64: 1, 96>}, {pipeline_mode = #tpu.pipeline_mode<synchronous>, transform_indices = @transform_4, window_bounds = array<i64: 32, 32>}, {pipeline_mode = #tpu.pipeline_mode<synchronous>, transform_indices = @transform_5, window_bounds = array<i64: 1, 32>}, {pipeline_mode = #tpu.pipeline_mode<synchronous>, transform_indices = @transform_6, window_bounds = array<i64: 1, 32>}, {pipeline_mode = #tpu.pipeline_mode<synchronous>, transform_indices = @transform_7, window_bounds = array<i64: 1, 32>}, {pipeline_mode = #tpu.pipeline_mode<synchronous>, transform_indices = @transform_8, window_bounds = array<i64: 32, 64>}, {pipeline_mode = #tpu.pipeline_mode<synchronous>, transform_indices = @transform_9, window_bounds = array<i64: 1, 64>}, {pipeline_mode = #tpu.pipeline_mode<synchronous>, transform_indices = @transform_10, window_bounds = array<i64: 64, 32>}, {pipeline_mode = #tpu.pipeline_mode<synchronous>, transform_indices = @transform_11, window_bounds = array<i64: 1, 32>}, {pipeline_mode = #tpu.pipeline_mode<synchronous>, transform_indices = @transform_12, window_bounds = array<i64: 1, 32>}, {pipeline_mode = #tpu.pipeline_mode<synchronous>, transform_indices = @transform_13, window_bounds = array<i64: 1, 32>}, {transform_indices = @transform_14, window_bounds = array<i64: 8, 32>}]} {
    %c0 = arith.constant 0 : index
    %c0_0 = arith.constant 0 : index
    %0 = vector.load %arg1[%c0, %c0_0] : memref<8x32xf32, #tpu.memory_space<vmem>>, vector<8x32xf32>
    %c0_1 = arith.constant 0 : index
    %c0_2 = arith.constant 0 : index
    %c0_3 = arith.constant 0 : index
    %1 = vector.load %arg2[%c0_1, %c0_2, %c0_3] : memref<1x1x8xf32, #tpu.memory_space<vmem>>, vector<1x1x8xf32>
    %2 = vector.shape_cast %1 : vector<1x1x8xf32> to vector<1x8xf32>
    %c0_4 = arith.constant 0 : index
    %c0_5 = arith.constant 0 : index
    %3 = vector.load %arg3[%c0_4, %c0_5] : memref<32x96xbf16, #tpu.memory_space<vmem>>, vector<32x96xbf16>
    %4 = arith.truncf %0 : vector<8x32xf32> to vector<8x32xbf16>
    %cst = arith.constant dense<0.000000e+00> : vector<8x96xf32>
    %5 = tpu.matmul %4, %3, %cst {dimension_numbers = #tpu.dot_dimension_numbers<[1], [0], [0], [1], [0, 0, 1, 1], [], []>} : vector<8x32xbf16>, vector<32x96xbf16>, vector<8x96xf32> -> vector<8x96xf32>
    %c0_6 = arith.constant 0 : index
    %c0_7 = arith.constant 0 : index
    %6 = vector.load %arg4[%c0_6, %c0_7] : memref<1x96xf32, #tpu.memory_space<vmem>>, vector<1x96xf32>
    %7 = vector.broadcast %6 : vector<1x96xf32> to vector<8x96xf32>
    %8 = arith.addf %5, %7 : vector<8x96xf32>
    %c0_8 = arith.constant 0 : index
    %c0_9 = arith.constant 0 : index
    %9 = vector.load %arg5[%c0_8, %c0_9] : memref<32x32xbf16, #tpu.memory_space<vmem>>, vector<32x32xbf16>
    %c0_10 = arith.constant 0 : index
    %c0_11 = arith.constant 0 : index
    %10 = vector.load %arg6[%c0_10, %c0_11] : memref<1x32xf32, #tpu.memory_space<vmem>>, vector<1x32xf32>
    %11 = vector.extract_strided_slice %8 {offsets = [0, 0], sizes = [8, 16], strides = [1, 1]} : vector<8x96xf32> to vector<8x16xf32>
    %12 = vector.extract_strided_slice %8 {offsets = [0, 32], sizes = [8, 16], strides = [1, 1]} : vector<8x96xf32> to vector<8x16xf32>
    %13 = vector.extract_strided_slice %8 {offsets = [0, 64], sizes = [8, 16], strides = [1, 1]} : vector<8x96xf32> to vector<8x16xf32>
    %14 = arith.truncf %11 : vector<8x16xf32> to vector<8x16xbf16>
    %15 = arith.truncf %12 : vector<8x16xf32> to vector<8x16xbf16>
    %cst_12 = arith.constant dense<0.000000e+00> : vector<8x8xf32>
    %16 = tpu.matmul %14, %15, %cst_12 {dimension_numbers = #tpu.dot_dimension_numbers<[1], [1], [0], [0], [0, 0, 1, 0], [], []>} : vector<8x16xbf16>, vector<8x16xbf16>, vector<8x8xf32> -> vector<8x8xf32>
    %cst_13 = arith.constant 2.500000e-01 : f32
    %17 = vector.broadcast %cst_13 : f32 to vector<8x8xf32>
    %18 = arith.mulf %16, %17 : vector<8x8xf32>
    %19 = vector.broadcast %2 : vector<1x8xf32> to vector<8x8xf32>
    %20 = arith.addf %18, %19 : vector<8x8xf32>
    %cst_14 = arith.constant dense<0xFF800000> : vector<8xf32>
    %21 = vector.multi_reduction <maximumf>, %20, %cst_14 [1] : vector<8x8xf32> to vector<8xf32>
    %22 = vector.shape_cast %21 : vector<8xf32> to vector<8x1xf32>
    %23 = vector.broadcast %22 : vector<8x1xf32> to vector<8x8xf32>
    %24 = arith.subf %20, %23 : vector<8x8xf32>
    %25 = math.exp %24 : vector<8x8xf32>
    %cst_15 = arith.constant dense<0.000000e+00> : vector<8xf32>
    %26 = vector.multi_reduction <add>, %25, %cst_15 [1] : vector<8x8xf32> to vector<8xf32>
    %27 = vector.shape_cast %26 : vector<8xf32> to vector<8x1xf32>
    %28 = tpu.reciprocal %27 {approx = true} : vector<8x1xf32> -> vector<8x1xf32>
    %29 = vector.broadcast %28 : vector<8x1xf32> to vector<8x8xf32>
    %30 = arith.mulf %25, %29 : vector<8x8xf32>
    %31 = arith.truncf %30 : vector<8x8xf32> to vector<8x8xbf16>
    %32 = arith.truncf %13 : vector<8x16xf32> to vector<8x16xbf16>
    %cst_16 = arith.constant dense<0.000000e+00> : vector<8x16xf32>
    %33 = tpu.matmul %31, %32, %cst_16 {dimension_numbers = #tpu.dot_dimension_numbers<[1], [0], [0], [1], [0, 0, 1, 1], [], []>} : vector<8x8xbf16>, vector<8x16xbf16>, vector<8x16xf32> -> vector<8x16xf32>
    %34 = vector.extract_strided_slice %9 {offsets = [0, 0], sizes = [16, 32], strides = [1, 1]} : vector<32x32xbf16> to vector<16x32xbf16>
    %35 = arith.truncf %33 : vector<8x16xf32> to vector<8x16xbf16>
    %cst_17 = arith.constant dense<0.000000e+00> : vector<8x32xf32>
    %36 = tpu.matmul %35, %34, %cst_17 {dimension_numbers = #tpu.dot_dimension_numbers<[1], [0], [0], [1], [0, 0, 1, 1], [], []>} : vector<8x16xbf16>, vector<16x32xbf16>, vector<8x32xf32> -> vector<8x32xf32>
    %37 = vector.broadcast %10 : vector<1x32xf32> to vector<8x32xf32>
    %38 = arith.addf %37, %36 : vector<8x32xf32>
    %39 = vector.extract_strided_slice %8 {offsets = [0, 16], sizes = [8, 16], strides = [1, 1]} : vector<8x96xf32> to vector<8x16xf32>
    %40 = vector.extract_strided_slice %8 {offsets = [0, 48], sizes = [8, 16], strides = [1, 1]} : vector<8x96xf32> to vector<8x16xf32>
    %41 = vector.extract_strided_slice %8 {offsets = [0, 80], sizes = [8, 16], strides = [1, 1]} : vector<8x96xf32> to vector<8x16xf32>
    %42 = arith.truncf %39 : vector<8x16xf32> to vector<8x16xbf16>
    %43 = arith.truncf %40 : vector<8x16xf32> to vector<8x16xbf16>
    %cst_18 = arith.constant dense<0.000000e+00> : vector<8x8xf32>
    %44 = tpu.matmul %42, %43, %cst_18 {dimension_numbers = #tpu.dot_dimension_numbers<[1], [1], [0], [0], [0, 0, 1, 0], [], []>} : vector<8x16xbf16>, vector<8x16xbf16>, vector<8x8xf32> -> vector<8x8xf32>
    %cst_19 = arith.constant 2.500000e-01 : f32
    %45 = vector.broadcast %cst_19 : f32 to vector<8x8xf32>
    %46 = arith.mulf %44, %45 : vector<8x8xf32>
    %47 = vector.broadcast %2 : vector<1x8xf32> to vector<8x8xf32>
    %48 = arith.addf %46, %47 : vector<8x8xf32>
    %cst_20 = arith.constant dense<0xFF800000> : vector<8xf32>
    %49 = vector.multi_reduction <maximumf>, %48, %cst_20 [1] : vector<8x8xf32> to vector<8xf32>
    %50 = vector.shape_cast %49 : vector<8xf32> to vector<8x1xf32>
    %51 = vector.broadcast %50 : vector<8x1xf32> to vector<8x8xf32>
    %52 = arith.subf %48, %51 : vector<8x8xf32>
    %53 = math.exp %52 : vector<8x8xf32>
    %cst_21 = arith.constant dense<0.000000e+00> : vector<8xf32>
    %54 = vector.multi_reduction <add>, %53, %cst_21 [1] : vector<8x8xf32> to vector<8xf32>
    %55 = vector.shape_cast %54 : vector<8xf32> to vector<8x1xf32>
    %56 = tpu.reciprocal %55 {approx = true} : vector<8x1xf32> -> vector<8x1xf32>
    %57 = vector.broadcast %56 : vector<8x1xf32> to vector<8x8xf32>
    %58 = arith.mulf %53, %57 : vector<8x8xf32>
    %59 = arith.truncf %58 : vector<8x8xf32> to vector<8x8xbf16>
    %60 = arith.truncf %41 : vector<8x16xf32> to vector<8x16xbf16>
    %cst_22 = arith.constant dense<0.000000e+00> : vector<8x16xf32>
    %61 = tpu.matmul %59, %60, %cst_22 {dimension_numbers = #tpu.dot_dimension_numbers<[1], [0], [0], [1], [0, 0, 1, 1], [], []>} : vector<8x8xbf16>, vector<8x16xbf16>, vector<8x16xf32> -> vector<8x16xf32>
    %62 = vector.extract_strided_slice %9 {offsets = [16, 0], sizes = [16, 32], strides = [1, 1]} : vector<32x32xbf16> to vector<16x32xbf16>
    %63 = arith.truncf %61 : vector<8x16xf32> to vector<8x16xbf16>
    %cst_23 = arith.constant dense<0.000000e+00> : vector<8x32xf32>
    %64 = tpu.matmul %63, %62, %cst_23 {dimension_numbers = #tpu.dot_dimension_numbers<[1], [0], [0], [1], [0, 0, 1, 1], [], []>} : vector<8x16xbf16>, vector<16x32xbf16>, vector<8x32xf32> -> vector<8x32xf32>
    %65 = arith.addf %38, %64 : vector<8x32xf32>
    %66 = arith.addf %65, %0 : vector<8x32xf32>
    %c0_24 = arith.constant 0 : index
    %c0_25 = arith.constant 0 : index
    %67 = vector.load %arg7[%c0_24, %c0_25] : memref<1x32xf32, #tpu.memory_space<vmem>>, vector<1x32xf32>
    %c0_26 = arith.constant 0 : index
    %c0_27 = arith.constant 0 : index
    %68 = vector.load %arg8[%c0_26, %c0_27] : memref<1x32xf32, #tpu.memory_space<vmem>>, vector<1x32xf32>
    %cst_28 = arith.constant dense<0.000000e+00> : vector<8xf32>
    %69 = vector.multi_reduction <add>, %66, %cst_28 [1] : vector<8x32xf32> to vector<8xf32>
    %70 = vector.shape_cast %69 : vector<8xf32> to vector<8x1xf32>
    %cst_29 = arith.constant 3.200000e+01 : f32
    %71 = vector.broadcast %cst_29 : f32 to vector<8x1xf32>
    %72 = arith.divf %70, %71 : vector<8x1xf32>
    %73 = vector.broadcast %72 : vector<8x1xf32> to vector<8x32xf32>
    %74 = arith.subf %66, %73 : vector<8x32xf32>
    %75 = arith.mulf %74, %74 : vector<8x32xf32>
    %cst_30 = arith.constant dense<0.000000e+00> : vector<8xf32>
    %76 = vector.multi_reduction <add>, %75, %cst_30 [1] : vector<8x32xf32> to vector<8xf32>
    %77 = vector.shape_cast %76 : vector<8xf32> to vector<8x1xf32>
    %cst_31 = arith.constant 3.200000e+01 : f32
    %78 = vector.broadcast %cst_31 : f32 to vector<8x1xf32>
    %79 = arith.divf %77, %78 : vector<8x1xf32>
    %80 = vector.broadcast %72 : vector<8x1xf32> to vector<8x32xf32>
    %81 = arith.subf %66, %80 : vector<8x32xf32>
    %cst_32 = arith.constant 9.99999974E-6 : f32
    %82 = vector.broadcast %cst_32 : f32 to vector<8x1xf32>
    %83 = arith.addf %79, %82 : vector<8x1xf32>
    %84 = math.rsqrt %83 : vector<8x1xf32>
    %85 = vector.broadcast %84 : vector<8x1xf32> to vector<8x32xf32>
    %86 = arith.mulf %81, %85 : vector<8x32xf32>
    %87 = vector.broadcast %67 : vector<1x32xf32> to vector<8x32xf32>
    %88 = arith.mulf %86, %87 : vector<8x32xf32>
    %89 = vector.broadcast %68 : vector<1x32xf32> to vector<8x32xf32>
    %90 = arith.addf %88, %89 : vector<8x32xf32>
    %c0_33 = arith.constant 0 : index
    %c0_34 = arith.constant 0 : index
    %91 = vector.load %arg9[%c0_33, %c0_34] : memref<32x64xbf16, #tpu.memory_space<vmem>>, vector<32x64xbf16>
    %92 = arith.truncf %90 : vector<8x32xf32> to vector<8x32xbf16>
    %cst_35 = arith.constant dense<0.000000e+00> : vector<8x64xf32>
    %93 = tpu.matmul %92, %91, %cst_35 {dimension_numbers = #tpu.dot_dimension_numbers<[1], [0], [0], [1], [0, 0, 1, 1], [], []>} : vector<8x32xbf16>, vector<32x64xbf16>, vector<8x64xf32> -> vector<8x64xf32>
    %c0_36 = arith.constant 0 : index
    %c0_37 = arith.constant 0 : index
    %94 = vector.load %arg10[%c0_36, %c0_37] : memref<1x64xf32, #tpu.memory_space<vmem>>, vector<1x64xf32>
    %95 = vector.broadcast %94 : vector<1x64xf32> to vector<8x64xf32>
    %96 = arith.addf %93, %95 : vector<8x64xf32>
    %97 = arith.mulf %96, %96 : vector<8x64xf32>
    %98 = arith.mulf %96, %97 : vector<8x64xf32>
    %cst_38 = arith.constant 4.471500e-02 : f32
    %99 = vector.broadcast %cst_38 : f32 to vector<8x64xf32>
    %100 = arith.mulf %99, %98 : vector<8x64xf32>
    %101 = arith.addf %96, %100 : vector<8x64xf32>
    %cst_39 = arith.constant 0.797884583 : f32
    %102 = vector.broadcast %cst_39 : f32 to vector<8x64xf32>
    %103 = arith.mulf %102, %101 : vector<8x64xf32>
    %104 = math.tanh %103 : vector<8x64xf32>
    %cst_40 = arith.constant 1.000000e+00 : f32
    %105 = vector.broadcast %cst_40 : f32 to vector<8x64xf32>
    %106 = arith.addf %105, %104 : vector<8x64xf32>
    %cst_41 = arith.constant 5.000000e-01 : f32
    %107 = vector.broadcast %cst_41 : f32 to vector<8x64xf32>
    %108 = arith.mulf %107, %106 : vector<8x64xf32>
    %109 = arith.mulf %96, %108 : vector<8x64xf32>
    %c0_42 = arith.constant 0 : index
    %c0_43 = arith.constant 0 : index
    %110 = vector.load %arg11[%c0_42, %c0_43] : memref<64x32xbf16, #tpu.memory_space<vmem>>, vector<64x32xbf16>
    %111 = arith.truncf %109 : vector<8x64xf32> to vector<8x64xbf16>
    %cst_44 = arith.constant dense<0.000000e+00> : vector<8x32xf32>
    %112 = tpu.matmul %111, %110, %cst_44 {dimension_numbers = #tpu.dot_dimension_numbers<[1], [0], [0], [1], [0, 0, 1, 1], [], []>} : vector<8x64xbf16>, vector<64x32xbf16>, vector<8x32xf32> -> vector<8x32xf32>
    %c0_45 = arith.constant 0 : index
    %c0_46 = arith.constant 0 : index
    %113 = vector.load %arg12[%c0_45, %c0_46] : memref<1x32xf32, #tpu.memory_space<vmem>>, vector<1x32xf32>
    %114 = vector.broadcast %113 : vector<1x32xf32> to vector<8x32xf32>
    %115 = arith.addf %112, %114 : vector<8x32xf32>
    %116 = arith.addf %115, %90 : vector<8x32xf32>
    %c0_47 = arith.constant 0 : index
    %c0_48 = arith.constant 0 : index
    %117 = vector.load %arg13[%c0_47, %c0_48] : memref<1x32xf32, #tpu.memory_space<vmem>>, vector<1x32xf32>
    %c0_49 = arith.constant 0 : index
    %c0_50 = arith.constant 0 : index
    %118 = vector.load %arg14[%c0_49, %c0_50] : memref<1x32xf32, #tpu.memory_space<vmem>>, vector<1x32xf32>
    %cst_51 = arith.constant dense<0.000000e+00> : vector<8xf32>
    %119 = vector.multi_reduction <add>, %116, %cst_51 [1] : vector<8x32xf32> to vector<8xf32>
    %120 = vector.shape_cast %119 : vector<8xf32> to vector<8x1xf32>
    %cst_52 = arith.constant 3.200000e+01 : f32
    %121 = vector.broadcast %cst_52 : f32 to vector<8x1xf32>
    %122 = arith.divf %120, %121 : vector<8x1xf32>
    %123 = vector.broadcast %122 : vector<8x1xf32> to vector<8x32xf32>
    %124 = arith.subf %116, %123 : vector<8x32xf32>
    %125 = arith.mulf %124, %124 : vector<8x32xf32>
    %cst_53 = arith.constant dense<0.000000e+00> : vector<8xf32>
    %126 = vector.multi_reduction <add>, %125, %cst_53 [1] : vector<8x32xf32> to vector<8xf32>
    %127 = vector.shape_cast %126 : vector<8xf32> to vector<8x1xf32>
    %cst_54 = arith.constant 3.200000e+01 : f32
    %128 = vector.broadcast %cst_54 : f32 to vector<8x1xf32>
    %129 = arith.divf %127, %128 : vector<8x1xf32>
    %130 = vector.broadcast %122 : vector<8x1xf32> to vector<8x32xf32>
    %131 = arith.subf %116, %130 : vector<8x32xf32>
    %cst_55 = arith.constant 9.99999974E-6 : f32
    %132 = vector.broadcast %cst_55 : f32 to vector<8x1xf32>
    %133 = arith.addf %129, %132 : vector<8x1xf32>
    %134 = math.rsqrt %133 : vector<8x1xf32>
    %135 = vector.broadcast %134 : vector<8x1xf32> to vector<8x32xf32>
    %136 = arith.mulf %131, %135 : vector<8x32xf32>
    %137 = vector.broadcast %117 : vector<1x32xf32> to vector<8x32xf32>
    %138 = arith.mulf %136, %137 : vector<8x32xf32>
    %139 = vector.broadcast %118 : vector<1x32xf32> to vector<8x32xf32>
    %140 = arith.addf %138, %139 : vector<8x32xf32>
    %c0_56 = arith.constant 0 : index
    %c0_57 = arith.constant 0 : index
    %141 = vector.load %arg15[%c0_56, %c0_57] : memref<8x32xf32, #tpu.memory_space<vmem>>, vector<8x32xf32>
    tpu.vector_store %arg15[%c0_56, %c0_57], %140 {strides = array<i32>} : memref<8x32xf32, #tpu.memory_space<vmem>>, vector<8x32xf32>,
    return
  }
  func.func @transform_0(%arg0: i32) -> (i32, i32) {
    %c0_i32 = arith.constant 0 : i32
    %c0_i32_0 = arith.constant 0 : i32
    return %arg0, %c0_i32 : i32, i32
  }
  func.func @transform_1(%arg0: i32) -> (i32, i32, i32) {
    %c0_i32 = arith.constant 0 : i32
    %c0_i32_0 = arith.constant 0 : i32
    %c0_i32_1 = arith.constant 0 : i32
    return %arg0, %c0_i32, %c0_i32_0 : i32, i32, i32
  }
  func.func @transform_2(%arg0: i32) -> (i32, i32) {
    %c0_i32 = arith.constant 0 : i32
    %c0_i32_0 = arith.constant 0 : i32
    %c0_i32_1 = arith.constant 0 : i32
    return %c0_i32, %c0_i32_0 : i32, i32
  }
  func.func @transform_3(%arg0: i32) -> (i32, i32) {
    %c0_i32 = arith.constant 0 : i32
    %c0_i32_0 = arith.constant 0 : i32
    %c0_i32_1 = arith.constant 0 : i32
    return %c0_i32, %c0_i32_0 : i32, i32
  }
  func.func @transform_4(%arg0: i32) -> (i32, i32) {
    %c0_i32 = arith.constant 0 : i32
    %c0_i32_0 = arith.constant 0 : i32
    %c0_i32_1 = arith.constant 0 : i32
    return %c0_i32, %c0_i32_0 : i32, i32
  }
  func.func @transform_5(%arg0: i32) -> (i32, i32) {
    %c0_i32 = arith.constant 0 : i32
    %c0_i32_0 = arith.constant 0 : i32
    %c0_i32_1 = arith.constant 0 : i32
    return %c0_i32, %c0_i32_0 : i32, i32
  }
  func.func @transform_6(%arg0: i32) -> (i32, i32) {
    %c0_i32 = arith.constant 0 : i32
    %c0_i32_0 = arith.constant 0 : i32
    %c0_i32_1 = arith.constant 0 : i32
    return %c0_i32, %c0_i32_0 : i32, i32
  }
  func.func @transform_7(%arg0: i32) -> (i32, i32) {
    %c0_i32 = arith.constant 0 : i32
    %c0_i32_0 = arith.constant 0 : i32
    %c0_i32_1 = arith.constant 0 : i32
    return %c0_i32, %c0_i32_0 : i32, i32
  }
  func.func @transform_8(%arg0: i32) -> (i32, i32) {
    %c0_i32 = arith.constant 0 : i32
    %c0_i32_0 = arith.constant 0 : i32
    %c0_i32_1 = arith.constant 0 : i32
    return %c0_i32, %c0_i32_0 : i32, i32
  }
  func.func @transform_9(%arg0: i32) -> (i32, i32) {
    %c0_i32 = arith.constant 0 : i32
    %c0_i32_0 = arith.constant 0 : i32
    %c0_i32_1 = arith.constant 0 : i32
    return %c0_i32, %c0_i32_0 : i32, i32
  }
  func.func @transform_10(%arg0: i32) -> (i32, i32) {
    %c0_i32 = arith.constant 0 : i32
    %c0_i32_0 = arith.constant 0 : i32
    %c0_i32_1 = arith.constant 0 : i32
    return %c0_i32, %c0_i32_0 : i32, i32
  }
  func.func @transform_11(%arg0: i32) -> (i32, i32) {
    %c0_i32 = arith.constant 0 : i32
    %c0_i32_0 = arith.constant 0 : i32
    %c0_i32_1 = arith.constant 0 : i32
    return %c0_i32, %c0_i32_0 : i32, i32
  }
  func.func @transform_12(%arg0: i32) -> (i32, i32) {
    %c0_i32 = arith.constant 0 : i32
    %c0_i32_0 = arith.constant 0 : i32
    %c0_i32_1 = arith.constant 0 : i32
    return %c0_i32, %c0_i32_0 : i32, i32
  }
  func.func @transform_13(%arg0: i32) -> (i32, i32) {
    %c0_i32 = arith.constant 0 : i32
    %c0_i32_0 = arith.constant 0 : i32
    %c0_i32_1 = arith.constant 0 : i32
    return %c0_i32, %c0_i32_0 : i32, i32
  }
  func.func @transform_14(%arg0: i32) -> (i32, i32) {
    %c0_i32 = arith.constant 0 : i32
    %c0_i32_0 = arith.constant 0 : i32
    return %arg0, %c0_i32 : i32, i32
  }
}

</mosaic_0001>

<llo_original>
// kernel: chembert_forward.4
$region0: #{chembert_forward.4}
  #allocation0 [shape = 'u32[]', space=smem, size = 0x4, offset = 0x4, fixed_abs, tag = 'smem constant byte address 0x4 - core index']
  #allocation1 [shape = 'u32[72,128]{1,0:T(1,128)}', space=vmem, size = 0x9000, scoped, tag = 'internal scratch']
  %s0 = inlined_call_operand.vmem [shape: f32[16,32], index: 0, kind: input, shape index: {}]
  %s1 = inlined_call_operand.vmem [shape: f32[1,32], index: 1, kind: input, shape index: {}]
  %s2 = inlined_call_operand.vmem [shape: f32[1,32], index: 2, kind: input, shape index: {}]
  %s3 = inlined_call_operand.vmem [shape: f32[16,32], index: 3, kind: output, shape index: {}]
  %s4 = sld [smem:[#allocation0]]
  $region45: #{chembert_forward.4} parent=0
    _
  %s6 = ssub.s32 1, %s4
  %s7 = scalar_select 0, %s6, %s4
  loop: start=0, step=1, limit=4
  $region2: #{chembert_forward.4} parent=0 // loop_pre_header
    _
  $region3: #{chembert_forward.4} parent=0 // loop_header
    %s9 = sphi 0, %s13
    %p10 = scmp.ge.s32.totalorder %s9, 4
    %s19 = sphi 0, %s21
    %s22 = sphi 0, %s19
    %s23 = sphi 0, %s22
    %s39 = sphi 0, %s23
    %s43 = sphi 0, %s43
    %s45 = sphi 0, %s43
    %s46 = sphi 0, %s45
    %s60 = sphi 0, %s46
    %s64 = sphi 0, %s64
    %s66 = sphi 0, %s64
    %s67 = sphi 0, %s66
    %s81 = sphi 0, %s67
    %s87 = sphi 0, %s89
    %s90 = sphi 0, %s87
    %s91 = sphi 0, %s90
    %s107 = sphi 0, %s91
  $region4: #{chembert_forward.4} parent=0 // loop_header_branch
    %12 = sbr.rel (%p10) target = $region8
  $region5: #{chembert_forward.4} parent=0 // loop_body
    %s14 = ssub.s32 %s9, 1
    %s15 = ssub.s32 %s9, 2
    %s16 = sadd.s32 %s9, 1
    %s17 = ssub.s32 %s9, %s16
    %p18 = scmp.eq.s32.totalorder %s17, 0
    %s20 = sadd.s32 %s19, 1
    %s21 = scalar_select %p18, %s19, %s20
    %p24 = pneg %p18
    %p25 = scmp.eq.s32.totalorder %s9, 1
    %p26 = por %p24, %p25
    %p27 = scmp.ne.s32.totalorder %s19, %s22
    %p28 = scmp.eq.s32.totalorder %s9, 0
    %p29 = por %p27, %p28
    %p30 = scmp.ne.s32.totalorder %s19, %s22
    %p31 = scmp.eq.s32.totalorder %s14, 1
    %p32 = por %p30, %p31
    %p33 = scmp.ne.s32.totalorder %s22, %s23
    %p34 = scmp.eq.s32.totalorder %s14, 0
    %p35 = por %p33, %p34
    %p36 = scmp.ne.s32.totalorder %s22, %s23
    %p37 = scmp.eq.s32.totalorder %s15, 1
    %p38 = por %p36, %p37
    %p40 = scmp.ne.s32.totalorder %s23, %s39
    %p41 = scmp.eq.s32.totalorder %s15, 0
    %p42 = por %p40, %p41
    %s44 = sadd.s32 %s43, 1
    %p47 = scmp.eq.s32.totalorder %s9, 1
    %p48 = scmp.ne.s32.totalorder %s43, %s45
    %p49 = scmp.eq.s32.totalorder %s9, 0
    %p50 = por %p48, %p49
    %p51 = scmp.ne.s32.totalorder %s43, %s45
    %p52 = scmp.eq.s32.totalorder %s14, 1
    %p53 = por %p51, %p52
    %p54 = scmp.ne.s32.totalorder %s45, %s46
    %p55 = scmp.eq.s32.totalorder %s14, 0
    %p56 = por %p54, %p55
    %p57 = scmp.ne.s32.totalorder %s45, %s46
    %p58 = scmp.eq.s32.totalorder %s15, 1
    %p59 = por %p57, %p58
    %p61 = scmp.ne.s32.totalorder %s46, %s60
    %p62 = scmp.eq.s32.totalorder %s15, 0
    %p63 = por %p61, %p62
    %s65 = sadd.s32 %s64, 1
    %p68 = scmp.eq.s32.totalorder %s9, 1
    %p69 = scmp.ne.s32.totalorder %s64, %s66
    %p70 = scmp.eq.s32.totalorder %s9, 0
    %p71 = por %p69, %p70
    %p72 = scmp.ne.s32.totalorder %s64, %s66
    %p73 = scmp.eq.s32.totalorder %s14, 1
    %p74 = por %p72, %p73
    %p75 = scmp.ne.s32.totalorder %s66, %s67
    %p76 = scmp.eq.s32.totalorder %s14, 0
    %p77 = por %p75, %p76
    %p78 = scmp.ne.s32.totalorder %s66, %s67
    %p79 = scmp.eq.s32.totalorder %s15, 1
    %p80 = por %p78, %p79
    %p82 = scmp.ne.s32.totalorder %s67, %s81
    %p83 = scmp.eq.s32.totalorder %s15, 0
    %p84 = por %p82, %p83
    %s85 = ssub.s32 %s9, %s16
    %p86 = scmp.eq.s32.totalorder %s85, 0
    %s88 = sadd.s32 %s87, 1
    %s89 = scalar_select %p86, %s87, %s88
    %p92 = pneg %p86
    %p93 = scmp.eq.s32.totalorder %s9, 1
    %p94 = por %p92, %p93
    %p95 = scmp.ne.s32.totalorder %s87, %s90
    %p96 = scmp.eq.s32.totalorder %s9, 0
    %p97 = por %p95, %p96
    %p98 = scmp.ne.s32.totalorder %s87, %s90
    %p99 = scmp.eq.s32.totalorder %s14, 1
    %p100 = por %p98, %p99
    %p101 = scmp.ne.s32.totalorder %s90, %s91
    %p102 = scmp.eq.s32.totalorder %s14, 0
    %p103 = por %p101, %p102
    %p104 = scmp.ne.s32.totalorder %s90, %s91
    %p105 = scmp.eq.s32.totalorder %s15, 1
    %p106 = por %p104, %p105
    %p108 = scmp.ne.s32.totalorder %s91, %s107
    %p109 = scmp.eq.s32.totalorder %s15, 0
    %p110 = por %p108, %p109
    %p111 = scmp.le.s32.totalorder 1, %s9
    %p112 = scmp.lt.s32.totalorder %s9, 3
    %p113 = pnand %p111, %p112
    %p114 = pneg %p113
    // Predicated region
    $region9: #{chembert_forward.4} parent=5 // pred_check
      _
    $region10: #{chembert_forward.4} parent=5 // pred_check_branch
      %116 = sbr.rel (%p113) target = $region12
    $region11: #{chembert_forward.4} parent=5 // pred_region
      %s117 = ssub.s32 %s9, 1
      // Predicated region
      $region13: #{chembert_forward.4} parent=11 // pred_check
        %p118 = pneg %p56
      $region14: #{chembert_forward.4} parent=11 // pred_check_branch
        %120 = sbr.rel (%p118) target = $region16
      $region15: #{chembert_forward.4} parent=11 // pred_region
        _
      $region16: #{chembert_forward.4} parent=11 // pred_fallthru
        _
      // Predicated region
      $region17: #{chembert_forward.4} parent=11 // pred_check
        %p121 = pneg %p77
      $region18: #{chembert_forward.4} parent=11 // pred_check_branch
        %123 = sbr.rel (%p121) target = $region20
      $region19: #{chembert_forward.4} parent=11 // pred_region
        _
      $region20: #{chembert_forward.4} parent=11 // pred_fallthru
        _
    $region12: #{chembert_forward.4} parent=5 // pred_fallthru
      _
    %p124 = scmp.lt.s32.totalorder %s9, 2
    // Predicated region
    $region21: #{chembert_forward.4} parent=5 // pred_check
      %p125 = pneg %p124
    $region22: #{chembert_forward.4} parent=5 // pred_check_branch
      %127 = sbr.rel (%p125) target = $region24
    $region23: #{chembert_forward.4} parent=5 // pred_region
      // Predicated region
      $region25: #{chembert_forward.4} parent=23 // pred_check
        %p128 = pneg %p29
      $region26: #{chembert_forward.4} parent=23 // pred_check_branch
        %130 = sbr.rel (%p128) target = $region28
      $region27: #{chembert_forward.4} parent=23 // pred_region
        %p131 = scmp.lt.s32.totalorder %s9, 1
        %s132 = scalar_select %p131, %s9, 1
        %s133 = smul.addr %s132, 8
        %s134 = scalar_lea.vmem %s0, %s133
      $region28: #{chembert_forward.4} parent=23 // pred_fallthru
        _
    $region24: #{chembert_forward.4} parent=5 // pred_fallthru
      _
    %p135 = scmp.le.s32.totalorder 1, %s9
    %p136 = scmp.lt.s32.totalorder %s9, 3
    %p137 = pnand %p135, %p136
    %p138 = pneg %p137
    // Predicated region
    $region29: #{chembert_forward.4} parent=5 // pred_check
      _
    $region30: #{chembert_forward.4} parent=5 // pred_check_branch
      %140 = sbr.rel (%p137) target = $region32
    $region31: #{chembert_forward.4} parent=5 // pred_region
      %s141 = ssub.s32 %s9, 1
      %p142 = scmp.lt.s32.totalorder %s14, 1
      %s143 = scalar_select %p142, %s14, 1
      %s144 = smul.addr %s143, 8
      %s145 = scalar_lea.vmem %s0, %s144
      %p146 = pneg %p35
      %p147 = pneg %p32
      %p148 = pneg %p56
      %p149 = pneg %p53
      %p150 = pneg %p77
      %p151 = pneg %p74
      %p152 = pneg %p103
      %p153 = pneg %p100
      %p154 = scmp.lt.s32.totalorder %s14, 1
      %s155 = scalar_select %p154, %s14, 1
      %s156 = smul.addr %s155, 8
      %s157 = scalar_lea.vmem %s3, %s156
      %p158 = scmp.lt.s32.totalorder %s14, 1
      %s159 = scalar_select %p158, %s14, 1
      %s160 = smul.addr %s159, 8
      %s161 = scalar_lea.vmem %s0, %s160
      %p162 = scmp.lt.s32.totalorder %s14, 1
      %s163 = scalar_select %p162, %s14, 1
      %s164 = smul.addr %s163, 8
      %s165 = scalar_lea.vmem %s3, %s164
      %v166 = vld [vmem:[%s161] sm:$0xff]
      %v167 = vld [vmem:[%s1] sm:$0x1]
      %v168 = vld [vmem:[%s2] sm:$0x1]
      %vm169 = vcmask 261120
      %v170 = vsel %vm169, %v166, 0.0
      %171 = vadd.xlane.f32.xlu0 %v170
      %v172 = vpop.xlane.xlu0 %171
      %v173 = vrcp.pop 32.0
      %v174 = vmul.f32 32.0, %v173
      %v175 = vsub.f32 1.0, %v174
      %v176 = vmul.f32 %v173, %v175
      %v177 = vadd.f32 %v173, %v176
      %vm178 = vweird.f32 %v173
      %v179 = vsel %vm178, %v173, %v177
      %v180 = vmul.f32 %v172, %v179
      %v181 = vsub.f32 %v166, %v180
      %v182 = vmul.f32 %v181, %v181
      %v183 = vsel %vm169, %v182, 0.0
      %184 = vadd.xlane.f32.xlu0 %v183
      %v185 = vpop.xlane.xlu0 %184
      %v186 = vmul.f32 %v185, %v179
      %v187 = vadd.f32 %v186, 1e-05
      %v188 = vrsqrt.pop %v187
      %v189 = vmul.f32 %v188, %v187
      %v190 = vmul.f32 %v189, %v188
      %v191 = vmul.f32 0.5, %v190
      %v192 = vsub.f32 1.5, %v191
      %v193 = vmul.f32 %v188, %v192
      %vm194 = vweird.f32 %v187
      %vm195 = vweird.f32 %v188
      %vm196 = vmor %vm194, %vm195
      %v197 = vsel %vm196, %v188, %v193
      %v198 = vmul.f32 %v181, %v197
      %v200 = vperm.slane %v167, 0
      %v202 = vmul.f32 %v198, %v200
      %v204 = vperm.slane %v168, 0
      %v206 = vadd.f32 %v202, %v204
      %207 = vst.msk [vmem:[%s165] sm:$0xff] %vm169, %v206
      %p208 = scmp.lt.s32.totalorder %s14, 1
      %s209 = scalar_select %p208, %s14, 1
      %s210 = smul.addr %s209, 8
      %s211 = scalar_lea.vmem %s3, %s210
      // Predicated region
      $region33: #{chembert_forward.4} parent=31 // pred_check
        %p212 = pneg %p100
      $region34: #{chembert_forward.4} parent=31 // pred_check_branch
        %214 = sbr.rel (%p212) target = $region36
      $region35: #{chembert_forward.4} parent=31 // pred_region
        _
      $region36: #{chembert_forward.4} parent=31 // pred_fallthru
        _
    $region32: #{chembert_forward.4} parent=5 // pred_fallthru
      _
    %p215 = scmp.le.s32.totalorder 2, %s9
    // Predicated region
    $region37: #{chembert_forward.4} parent=5 // pred_check
      %p216 = pneg %p215
    $region38: #{chembert_forward.4} parent=5 // pred_check_branch
      %218 = sbr.rel (%p216) target = $region40
    $region39: #{chembert_forward.4} parent=5 // pred_region
      %s219 = ssub.s32 %s9, 2
      // Predicated region
      $region41: #{chembert_forward.4} parent=39 // pred_check
        %p220 = pneg %p106
      $region42: #{chembert_forward.4} parent=39 // pred_check_branch
        %222 = sbr.rel (%p220) target = $region44
      $region43: #{chembert_forward.4} parent=39 // pred_region
        %p223 = scmp.lt.s32.totalorder %s15, 1
        %s224 = scalar_select %p223, %s15, 1
        %s225 = smul.addr %s224, 8
        %s226 = scalar_lea.vmem %s3, %s225
      $region44: #{chembert_forward.4} parent=39 // pred_fallthru
        _
    $region40: #{chembert_forward.4} parent=5 // pred_fallthru
      _
  $region6: #{chembert_forward.4} parent=0 // loop_footer
    %s13 = sadd.s32 1, %s9
  $region7: #{chembert_forward.4} parent=0 // loop_footer_branch
    %8 = sbr.rel target = $region3
  $region8: #{chembert_forward.4} parent=0 // loop_exit
    _

// kernel: chembert_forward.7
$region0: #{chembert_forward.7}
  #allocation0 [shape = 'u32[]', space=smem, size = 0x4, offset = 0x4, fixed_abs, tag = 'smem constant byte address 0x4 - core index']
  #allocation1 [shape = 'u32[72,128]{1,0:T(1,128)}', space=vmem, size = 0x9000, scoped, tag = 'internal scratch']
  #allocation2 [shape = 'f32[1,1]{1,0:T(1,128)S(1)}', space=vmem, size = 0x200, scoped, tag = 'scoped memory for chembert_forward.7']
  #allocation3 [shape = 'f32[1,1]{1,0:T(1,128)S(1)}', space=vmem, size = 0x200, scoped, tag = 'scoped memory for chembert_forward.7']
  %s0 = inlined_call_operand.vmem [shape: f32[2,32], index: 0, kind: input, shape index: {}]
  %s1 = inlined_call_operand.vmem [shape: f32[2,34], index: 1, kind: input, shape index: {}]
  %s2 = inlined_call_operand.vmem [shape: bf16[32,32], index: 2, kind: input, shape index: {}]
  %s3 = inlined_call_operand.vmem [shape: f32[1,32], index: 3, kind: input, shape index: {}]
  %s4 = inlined_call_operand.vmem [shape: f32[32,1], index: 4, kind: input, shape index: {}]
  %s5 = inlined_call_operand.<no memory space> [shape: f32[1,1], index: 5, kind: input, shape index: {}, may-alias: {5,12}]
  %s6 = inlined_call_operand.hbm [shape: f32[1,64], index: 6, kind: input, shape index: {}]
  %s7 = inlined_call_operand.vmem [shape: bf16[34,64], index: 7, kind: input, shape index: {}]
  %s8 = inlined_call_operand.vmem [shape: f32[1,64], index: 8, kind: input, shape index: {}, may-alias: {8,10}]
  %s9 = inlined_call_operand.vmem [shape: f32[1,64], index: 9, kind: input, shape index: {}]
  %s10 = inlined_call_operand.vmem [shape: f32[1,64], index: 10, kind: input, shape index: {}, may-alias: {8,10}]
  %s11 = inlined_call_operand.vmem [shape: f32[64,1], index: 11, kind: input, shape index: {}]
  %s12 = inlined_call_operand.<no memory space> [shape: f32[1,1], index: 12, kind: input, shape index: {}, may-alias: {5,12}]
  %s13 = inlined_call_operand.vmem [shape: f32[2,1], index: 13, kind: output, shape index: {}]
  %s14 = sld [smem:[#allocation0]]
  $region66: #{chembert_forward.7} parent=0
    _
  %s16 = ssub.s32 1, %s14
  %s17 = scalar_select 0, %s16, %s14
  %v18 = vstv %s5
  %19 = vst [vmem:[#allocation2] sm:$0x1] %v18
  %v20 = vstv %s12
  %21 = vst [vmem:[#allocation3] sm:$0x1] %v20
  $region1: #{chembert_forward.7} parent=0
    #allocation4 [shape = 'u8[512]{0}', space=vmem, size = 0x400, scoped, tag = 'input window, operand 6, single buffered']
    #allocation5 [shape = 's32[1]{0}', space=sflag, size = 0x4, scoped, tag = 'scoped memory for chembert_forward.7']
    %22 = vsyncpa [#allocation5], 0
    // Predicated region
    $region2: #{chembert_forward.7} parent=1 // pred_check
      _
    $region3: #{chembert_forward.7} parent=1 // pred_check_branch
      %24 = sbr.rel (0) target = $region5
    $region4: #{chembert_forward.7} parent=1 // pred_region
      _
    $region5: #{chembert_forward.7} parent=1 // pred_fallthru
      _
    // Predicated region
    $region6: #{chembert_forward.7} parent=1 // pred_check
      _
    $region7: #{chembert_forward.7} parent=1 // pred_check_branch
      %26 = sbr.rel (0) target = $region9
    $region8: #{chembert_forward.7} parent=1 // pred_region
      _
    $region9: #{chembert_forward.7} parent=1 // pred_fallthru
      _
    // Predicated region
    $region10: #{chembert_forward.7} parent=1 // pred_check
      _
    $region11: #{chembert_forward.7} parent=1 // pred_check_branch
      %28 = sbr.rel (0) target = $region13
    $region12: #{chembert_forward.7} parent=1 // pred_region
      _
    $region13: #{chembert_forward.7} parent=1 // pred_fallthru
      _
    // Predicated region
    $region14: #{chembert_forward.7} parent=1 // pred_check
      _
    $region15: #{chembert_forward.7} parent=1 // pred_check_branch
      %30 = sbr.rel (0) target = $region17
    $region16: #{chembert_forward.7} parent=1 // pred_region
      _
    $region17: #{chembert_forward.7} parent=1 // pred_fallthru
      _
    // Predicated region
    $region18: #{chembert_forward.7} parent=1 // pred_check
      _
    $region19: #{chembert_forward.7} parent=1 // pred_check_branch
      %32 = sbr.rel (0) target = $region21
    $region20: #{chembert_forward.7} parent=1 // pred_region
      _
    $region21: #{chembert_forward.7} parent=1 // pred_fallthru
      _
    // Predicated region
    $region22: #{chembert_forward.7} parent=1 // pred_check
      _
    $region23: #{chembert_forward.7} parent=1 // pred_check_branch
      %34 = sbr.rel (0) target = $region25
    $region24: #{chembert_forward.7} parent=1 // pred_region
      _
    $region25: #{chembert_forward.7} parent=1 // pred_fallthru
      _
    // Predicated region
    $region26: #{chembert_forward.7} parent=1 // pred_check
      _
    $region27: #{chembert_forward.7} parent=1 // pred_check_branch
      %36 = sbr.rel (0) target = $region29
    $region28: #{chembert_forward.7} parent=1 // pred_region
      %38 = vsyncadd [#allocation5], 0
      %s40 = sshll.u32 %s6, 4
      %s41 = int_to_ptr.hbm [resolvable:$true] %s40
      %s42 = sshll.u32 [#allocation4], 4
      %s43 = int_to_ptr.vmem [resolvable:$true] %s42
      %45 = dma.hbm_to_vmem [thread:$0]  %s41, 16, %s43, [#allocation5]
    $region29: #{chembert_forward.7} parent=1 // pred_fallthru
      _
    // Predicated region
    $region30: #{chembert_forward.7} parent=1 // pred_check
      _
    $region31: #{chembert_forward.7} parent=1 // pred_check_branch
      %47 = sbr.rel (0) target = $region33
    $region32: #{chembert_forward.7} parent=1 // pred_region
      _
    $region33: #{chembert_forward.7} parent=1 // pred_fallthru
      _
    // Predicated region
    $region34: #{chembert_forward.7} parent=1 // pred_check
      _
    $region35: #{chembert_forward.7} parent=1 // pred_check_branch
      %49 = sbr.rel (0) target = $region37
    $region36: #{chembert_forward.7} parent=1 // pred_region
      _
    $region37: #{chembert_forward.7} parent=1 // pred_fallthru
      _
    // Predicated region
    $region38: #{chembert_forward.7} parent=1 // pred_check
      _
    $region39: #{chembert_forward.7} parent=1 // pred_check_branch
      %51 = sbr.rel (0) target = $region41
    $region40: #{chembert_forward.7} parent=1 // pred_region
      _
    $region41: #{chembert_forward.7} parent=1 // pred_fallthru
      _
    // Predicated region
    $region42: #{chembert_forward.7} parent=1 // pred_check
      _
    $region43: #{chembert_forward.7} parent=1 // pred_check_branch
      %53 = sbr.rel (0) target = $region45
    $region44: #{chembert_forward.7} parent=1 // pred_region
      _
    $region45: #{chembert_forward.7} parent=1 // pred_fallthru
      _
    // Predicated region
    $region46: #{chembert_forward.7} parent=1 // pred_check
      _
    $region47: #{chembert_forward.7} parent=1 // pred_check_branch
      %55 = sbr.rel (0) target = $region49
    $region48: #{chembert_forward.7} parent=1 // pred_region
      _
    $region49: #{chembert_forward.7} parent=1 // pred_fallthru
      _
    // Predicated region
    $region50: #{chembert_forward.7} parent=1 // pred_check
      _
    $region51: #{chembert_forward.7} parent=1 // pred_check_branch
      %57 = sbr.rel (0) target = $region53
    $region52: #{chembert_forward.7} parent=1 // pred_region
      _
    $region53: #{chembert_forward.7} parent=1 // pred_fallthru
      _
    // Predicated region
    $region54: #{chembert_forward.7} parent=1 // pred_check
      _
    $region55: #{chembert_forward.7} parent=1 // pred_check_branch
      %59 = sbr.rel (0) target = $region57
    $region56: #{chembert_forward.7} parent=1 // pred_region
      %61 = dma.done [#allocation5], 16
    $region57: #{chembert_forward.7} parent=1 // pred_fallthru
      _
    %v63 = vld [vmem:[%s0] sm:$0x3]
    %v64 = vld [vmem:[%s2] sm:$0xf]
    %v65 = vld [vmem:[%s2 + $0x4] sm:$0xf]
    %v66 = vld [vmem:[%s2 + $0x8] sm:$0xf]
    %v67 = vld [vmem:[%s2 + $0xc] sm:$0xf]
    %v68 = vpack.c.bf16 %v63, %v63
    %v69 = vld [vmem:[%s3] sm:$0x1]
    %v71 = vperm.slane %v69, 0
    %v77 = vunpack.c.l.b16 %v64
    %v78 = vunpack.c.l.b16 %v65
    %v79 = vunpack.c.l.b16 %v66
    %v80 = vunpack.c.l.b16 %v67
    %v81 = vpack.c.b16 %v78, %v77
    %v82 = vpack.c.b16 %v80, %v79
    %vm85 = vcmask 261120
    %v87 = vsel %vm85, %v68, 0
    %89 = vmatpush.bf16.msra.mxu0 0
    %90 = vmatpush.bf16.msra.mxu0 0
    %91 = vmatpush.bf16.msra.mxu0 0
    %92 = vmatpush.bf16.msra.mxu0 0
    %93 = vmatpush.bf16.msra.mxu0 0
    %94 = vmatpush.bf16.msra.mxu0 0
    %95 = vmatpush.bf16.msra.mxu0 %v82
    %96 = vmatpush.bf16.msra.mxu0 %v81
    %97 = vmatmul.bf16.gmra.mxu0 %v87
    %v98 = vpop.f32.mrf.mxu0
    %v99 = vadd.f32 %v71, %v98
    %v100 = vpop.f32.mrf.mxu0
    %101 = vdwg.mxu0
    %v102 = vtanh.pop %v99
    %v103 = vld [vmem:[%s4] sm:$0xff]
    %v104 = vld [vmem:[%s4 + $0x8] sm:$0xff]
    %v105 = vld [vmem:[%s4 + $0x10] sm:$0xff]
    %v106 = vld [vmem:[%s4 + $0x18] sm:$0xff]
    %v107 = vld [vmem:[#allocation2] sm:$0x1]
    %v109 = vperm.slane %v107, 0
    %v112 = vsel %vm85, %v102, 0
    %114 = vmatpush.msra.mxu0 0.0
    %115 = vmatpush.msra.mxu0 0.0
    %116 = vmatpush.msra.mxu0 0.0
    %117 = vmatpush.msra.mxu0 0.0
    %118 = vmatpush.msra.mxu0 0.0
    %119 = vmatpush.msra.mxu0 0.0
    %120 = vmatpush.msra.mxu0 0.0
    %121 = vmatpush.msra.mxu0 0.0
    %122 = vmatpush.msra.mxu0 0.0
    %123 = vmatpush.msra.mxu0 0.0
    %124 = vmatpush.msra.mxu0 0.0
    %125 = vmatpush.msra.mxu0 0.0
    %126 = vmatpush.msra.mxu0 %v106
    %127 = vmatpush.msra.mxu0 %v105
    %128 = vmatpush.msra.mxu0 %v104
    %129 = vmatpush.msra.mxu0 %v103
    %130 = vmatmul.f32.gmra.mxu0 %v112
    %v131 = vpop.f32.mrf.mxu0
    %v132 = vadd.f32 %v109, %v131
    %133 = vdwg.mxu0
    %v134 = vld [vmem:[#allocation4] sm:$0x1]
    %136 = vset.pattern.permute.xlu0 0
    %137 = vperm.xlu0 %136, %v132
    %v138 = vpop.permute.xlu0 %137
    %v141 = vperm.slane %v134, 0
    %v143 = vmul.f32 %v138, %v141
    %v144 = vld [vmem:[%s1] sm:$0x3]
    %v145 = vld [vmem:[%s7] sm:$0xf]
    %v146 = vld [vmem:[%s7 + $0x4] sm:$0xf]
    %v147 = vld [vmem:[%s7 + $0x8] sm:$0xf]
    %v148 = vld [vmem:[%s7 + $0xc] sm:$0xf]
    %v149 = vld [vmem:[%s7 + $0x10] sm:$0x1]
    %v150 = vpack.c.bf16 %v144, %v144
    %v156 = vunpack.c.l.b16 %v145
    %v157 = vunpack.c.l.b16 %v146
    %v158 = vunpack.c.l.b16 %v147
    %v159 = vunpack.c.l.b16 %v148
    %v160 = vunpack.c.l.b16 %v149
    %v161 = vpack.c.b16 %v157, %v156
    %v162 = vpack.c.b16 %v159, %v158
    %v163 = vpack.c.b16 %v160, %v160
    %vm166 = vcmask 277504
    %v168 = vsel %vm166, %v150, 0
    %vm170 = vcmask 1040384
    %v172 = vsel %vm170, %v163, 0
    %174 = vmatpush.bf16.msra.mxu0 0
    %175 = vmatpush.bf16.msra.mxu0 0
    %176 = vmatpush.bf16.msra.mxu0 0
    %177 = vmatpush.bf16.msra.mxu0 0
    %178 = vmatpush.bf16.msra.mxu0 0
    %179 = vmatpush.bf16.msra.mxu0 %v172
    %180 = vmatpush.bf16.msra.mxu0 %v162
    %181 = vmatpush.bf16.msra.mxu0 %v161
    %182 = vmatmul.bf16.gmra.mxu0 %v168
    %v183 = vpop.f32.mrf.mxu0
    %v184 = vadd.f32 0.0, %v183
    %v185 = vpop.f32.mrf.mxu0
    %186 = vdwg.mxu0
    %v187 = vadd.f32 %v143, %v184
    %v188 = vld [vmem:[%s8] sm:$0x1]
    %v190 = vperm.slane %v188, 0
    %v192 = vadd.f32 %v187, %v190
    %v193 = vld [vmem:[%s9] sm:$0x1]
    %v194 = vld [vmem:[%s10] sm:$0x1]
    %vm195 = vcmask 517120
    %v196 = vsel %vm195, %v192, 0.0
    %197 = vadd.xlane.f32.xlu0 %v196
    %v198 = vpop.xlane.xlu0 %197
    %v199 = vrcp.pop 64.0
    %v200 = vmul.f32 64.0, %v199
    %v201 = vsub.f32 1.0, %v200
    %v202 = vmul.f32 %v199, %v201
    %v203 = vadd.f32 %v199, %v202
    %vm204 = vweird.f32 %v199
    %v205 = vsel %vm204, %v199, %v203
    %v206 = vmul.f32 %v198, %v205
    %v207 = vsub.f32 %v192, %v206
    %v208 = vmul.f32 %v207, %v207
    %v209 = vsel %vm195, %v208, 0.0
    %210 = vadd.xlane.f32.xlu0 %v209
    %v211 = vpop.xlane.xlu0 %210
    %v212 = vmul.f32 %v211, %v205
    %v213 = vadd.f32 %v212, 1e-05
    %v214 = vrsqrt.pop %v213
    %v215 = vmul.f32 %v214, %v213
    %v216 = vmul.f32 %v215, %v214
    %v217 = vmul.f32 0.5, %v216
    %v218 = vsub.f32 1.5, %v217
    %v219 = vmul.f32 %v214, %v218
    %vm220 = vweird.f32 %v213
    %vm221 = vweird.f32 %v214
    %vm222 = vmor %vm220, %vm221
    %v223 = vsel %vm222, %v214, %v219
    %v224 = vmul.f32 %v207, %v223
    %v226 = vperm.slane %v193, 0
    %v228 = vmul.f32 %v224, %v226
    %v230 = vperm.slane %v194, 0
    %v232 = vadd.f32 %v228, %v230
    %vm233 = vcmp.gt.f32.partialorder %v232, 0.0
    %v234 = vmin.f32 %v232, 0.0
    %v235 = vmul.f32 %v234, 1.442695
    %v236 = vpow.pop %v235
    %v237 = vsub.f32 %v236, 1.0
    %v238 = vmul.f32 %v237, 1.6732632
    %v239 = vsel %vm233, %v232, %v238
    %v240 = vmul.f32 %v239, 1.050701
    %v241 = vld [vmem:[%s11] sm:$0xff]
    %v242 = vld [vmem:[%s11 + $0x8] sm:$0xff]
    %v243 = vld [vmem:[%s11 + $0x10] sm:$0xff]
    %v244 = vld [vmem:[%s11 + $0x18] sm:$0xff]
    %v245 = vld [vmem:[%s11 + $0x20] sm:$0xff]
    %v246 = vld [vmem:[%s11 + $0x28] sm:$0xff]
    %v247 = vld [vmem:[%s11 + $0x30] sm:$0xff]
    %v248 = vld [vmem:[%s11 + $0x38] sm:$0xff]
    %v249 = vld [vmem:[#allocation3] sm:$0x1]
    %v251 = vperm.slane %v249, 0
    %vm253 = vcmask 523264
    %v255 = vsel %vm253, %v240, 0
    %257 = vmatpush.msra.mxu0 0.0
    %258 = vmatpush.msra.mxu0 0.0
    %259 = vmatpush.msra.mxu0 0.0
    %260 = vmatpush.msra.mxu0 0.0
    %261 = vmatpush.msra.mxu0 0.0
    %262 = vmatpush.msra.mxu0 0.0
    %263 = vmatpush.msra.mxu0 0.0
    %264 = vmatpush.msra.mxu0 0.0
    %265 = vmatpush.msra.mxu0 %v248
    %266 = vmatpush.msra.mxu0 %v247
    %267 = vmatpush.msra.mxu0 %v246
    %268 = vmatpush.msra.mxu0 %v245
    %269 = vmatpush.msra.mxu0 %v244
    %270 = vmatpush.msra.mxu0 %v243
    %271 = vmatpush.msra.mxu0 %v242
    %272 = vmatpush.msra.mxu0 %v241
    %273 = vmatmul.f32.gmra.mxu0 %v255
    %v274 = vpop.f32.mrf.mxu0
    %v275 = vadd.f32 %v251, %v274
    %276 = vdwg.mxu0
    %vm277 = vcmask 1024
    %278 = vst.msk [vmem:[%s13] sm:$0x3] %vm277, %v275
    // Predicated region
    $region58: #{chembert_forward.7} parent=1 // pred_check
      _
    $region59: #{chembert_forward.7} parent=1 // pred_check_branch
      %280 = sbr.rel (0) target = $region61
    $region60: #{chembert_forward.7} parent=1 // pred_region
      _
    $region61: #{chembert_forward.7} parent=1 // pred_fallthru
      _
    // Predicated region
    $region62: #{chembert_forward.7} parent=1 // pred_check
      _
    $region63: #{chembert_forward.7} parent=1 // pred_check_branch
      %282 = sbr.rel (0) target = $region65
    $region64: #{chembert_forward.7} parent=1 // pred_region
      _
    $region65: #{chembert_forward.7} parent=1 // pred_fallthru
      _
    %283 = vsyncpa [#allocation5], 1

// kernel: chembert_forward.5
$region0: #{chembert_forward.5}
  #allocation0 [shape = 'u32[]', space=smem, size = 0x4, offset = 0x4, fixed_abs, tag = 'smem constant byte address 0x4 - core index']
  #allocation1 [shape = 'u32[72,128]{1,0:T(1,128)}', space=vmem, size = 0x9000, scoped, tag = 'internal scratch']
  %s0 = inlined_call_operand.vmem [shape: f32[16,32], index: 0, kind: input, shape index: {}]
  %s1 = inlined_call_operand.vmem [shape: f32[2,1,8], index: 1, kind: input, shape index: {}]
  %s2 = inlined_call_operand.vmem [shape: bf16[32,96], index: 2, kind: input, shape index: {}]
  %s3 = inlined_call_operand.vmem [shape: f32[1,96], index: 3, kind: input, shape index: {}]
  %s4 = inlined_call_operand.hbm [shape: bf16[32,32], index: 4, kind: input, shape index: {}]
  %s5 = inlined_call_operand.vmem [shape: f32[1,32], index: 5, kind: input, shape index: {}, may-alias: {5,7,11,13}]
  %s6 = inlined_call_operand.vmem [shape: f32[1,32], index: 6, kind: input, shape index: {}, may-alias: {6,12}]
  %s7 = inlined_call_operand.vmem [shape: f32[1,32], index: 7, kind: input, shape index: {}, may-alias: {5,7,11,13}]
  %s8 = inlined_call_operand.hbm [shape: bf16[32,64], index: 8, kind: input, shape index: {}]
  %s9 = inlined_call_operand.vmem [shape: f32[1,64], index: 9, kind: input, shape index: {}]
  %s10 = inlined_call_operand.vmem [shape: bf16[64,32], index: 10, kind: input, shape index: {}]
  %s11 = inlined_call_operand.vmem [shape: f32[1,32], index: 11, kind: input, shape index: {}, may-alias: {5,7,11,13}]
  %s12 = inlined_call_operand.vmem [shape: f32[1,32], index: 12, kind: input, shape index: {}, may-alias: {6,12}]
  %s13 = inlined_call_operand.vmem [shape: f32[1,32], index: 13, kind: input, shape index: {}, may-alias: {5,7,11,13}]
  %s14 = inlined_call_operand.vmem [shape: f32[16,32], index: 14, kind: output, shape index: {}]
  %s15 = sld [smem:[#allocation0]]
  $region97: #{chembert_forward.5} parent=0
    _
  %s17 = ssub.s32 1, %s15
  %s18 = scalar_select 0, %s17, %s15
  $region1: #{chembert_forward.5} parent=0
    #allocation2 [shape = 'u8[8192]{0}', space=vmem, size = 0x2000, scoped, tag = 'input window, operand 4, single buffered']
    #allocation3 [shape = 's32[2]{0}', space=sflag, size = 0x8, scoped, tag = 'scoped memory for chembert_forward.5']
    #allocation4 [shape = 'u8[8192]{0}', space=vmem, size = 0x2000, scoped, tag = 'input window, operand 8, single buffered']
    #allocation5 [shape = 's32[1]{0}', space=sflag, size = 0x4, scoped, tag = 'scoped memory for chembert_forward.5']
    %19 = vsyncpa [#allocation3], 0
    %20 = vsyncpa [#allocation5], 0
    loop: start=0, step=1, limit=4
    $region2: #{chembert_forward.5} parent=1 // loop_pre_header
      _
    $region3: #{chembert_forward.5} parent=1 // loop_header
      %s22 = sphi 0, %s26
      %p23 = scmp.ge.s32.totalorder %s22, 4
      %s32 = sphi 0, %s34
      %s35 = sphi 0, %s32
      %s36 = sphi 0, %s35
      %s52 = sphi 0, %s36
      %s58 = sphi 0, %s60
      %s61 = sphi 0, %s58
      %s62 = sphi 0, %s61
      %s78 = sphi 0, %s62
      %s82 = sphi 0, %s82
      %s84 = sphi 0, %s82
      %s85 = sphi 0, %s84
      %s99 = sphi 0, %s85
      %s103 = sphi 0, %s103
      %s105 = sphi 0, %s103
      %s106 = sphi 0, %s105
      %s120 = sphi 0, %s106
      %s124 = sphi 0, %s124
      %s126 = sphi 0, %s124
      %s127 = sphi 0, %s126
      %s141 = sphi 0, %s127
      %s145 = sphi 0, %s145
      %s147 = sphi 0, %s145
      %s148 = sphi 0, %s147
      %s162 = sphi 0, %s148
      %s166 = sphi 0, %s166
      %s168 = sphi 0, %s166
      %s169 = sphi 0, %s168
      %s183 = sphi 0, %s169
      %s187 = sphi 0, %s187
      %s189 = sphi 0, %s187
      %s190 = sphi 0, %s189
      %s204 = sphi 0, %s190
      %s208 = sphi 0, %s208
      %s210 = sphi 0, %s208
      %s211 = sphi 0, %s210
      %s225 = sphi 0, %s211
      %s229 = sphi 0, %s229
      %s231 = sphi 0, %s229
      %s232 = sphi 0, %s231
      %s246 = sphi 0, %s232
      %s250 = sphi 0, %s250
      %s252 = sphi 0, %s250
      %s253 = sphi 0, %s252
      %s267 = sphi 0, %s253
      %s271 = sphi 0, %s271
      %s273 = sphi 0, %s271
      %s274 = sphi 0, %s273
      %s288 = sphi 0, %s274
      %s292 = sphi 0, %s292
      %s294 = sphi 0, %s292
      %s295 = sphi 0, %s294
      %s309 = sphi 0, %s295
      %s313 = sphi 0, %s313
      %s315 = sphi 0, %s313
      %s316 = sphi 0, %s315
      %s330 = sphi 0, %s316
      %s336 = sphi 0, %s338
      %s339 = sphi 0, %s336
      %s340 = sphi 0, %s339
      %s356 = sphi 0, %s340
    $region4: #{chembert_forward.5} parent=1 // loop_header_branch
      %25 = sbr.rel (%p23) target = $region8
    $region5: #{chembert_forward.5} parent=1 // loop_body
      %s27 = ssub.s32 %s22, 1
      %s28 = ssub.s32 %s22, 2
      %s29 = sadd.s32 %s22, 1
      %s30 = ssub.s32 %s22, %s29
      %p31 = scmp.eq.s32.totalorder %s30, 0
      %s33 = sadd.s32 %s32, 1
      %s34 = scalar_select %p31, %s32, %s33
      %p37 = pneg %p31
      %p38 = scmp.eq.s32.totalorder %s22, 1
      %p39 = por %p37, %p38
      %p40 = scmp.ne.s32.totalorder %s32, %s35
      %p41 = scmp.eq.s32.totalorder %s22, 0
      %p42 = por %p40, %p41
      %p43 = scmp.ne.s32.totalorder %s32, %s35
      %p44 = scmp.eq.s32.totalorder %s27, 1
      %p45 = por %p43, %p44
      %p46 = scmp.ne.s32.totalorder %s35, %s36
      %p47 = scmp.eq.s32.totalorder %s27, 0
      %p48 = por %p46, %p47
      %p49 = scmp.ne.s32.totalorder %s35, %s36
      %p50 = scmp.eq.s32.totalorder %s28, 1
      %p51 = por %p49, %p50
      %p53 = scmp.ne.s32.totalorder %s36, %s52
      %p54 = scmp.eq.s32.totalorder %s28, 0
      %p55 = por %p53, %p54
      %s56 = ssub.s32 %s22, %s29
      %p57 = scmp.eq.s32.totalorder %s56, 0
      %s59 = sadd.s32 %s58, 1
      %s60 = scalar_select %p57, %s58, %s59
      %p63 = pneg %p57
      %p64 = scmp.eq.s32.totalorder %s22, 1
      %p65 = por %p63, %p64
      %p66 = scmp.ne.s32.totalorder %s58, %s61
      %p67 = scmp.eq.s32.totalorder %s22, 0
      %p68 = por %p66, %p67
      %p69 = scmp.ne.s32.totalorder %s58, %s61
      %p70 = scmp.eq.s32.totalorder %s27, 1
      %p71 = por %p69, %p70
      %p72 = scmp.ne.s32.totalorder %s61, %s62
      %p73 = scmp.eq.s32.totalorder %s27, 0
      %p74 = por %p72, %p73
      %p75 = scmp.ne.s32.totalorder %s61, %s62
      %p76 = scmp.eq.s32.totalorder %s28, 1
      %p77 = por %p75, %p76
      %p79 = scmp.ne.s32.totalorder %s62, %s78
      %p80 = scmp.eq.s32.totalorder %s28, 0
      %p81 = por %p79, %p80
      %s83 = sadd.s32 %s82, 1
      %p86 = scmp.eq.s32.totalorder %s22, 1
      %p87 = scmp.ne.s32.totalorder %s82, %s84
      %p88 = scmp.eq.s32.totalorder %s22, 0
      %p89 = por %p87, %p88
      %p90 = scmp.ne.s32.totalorder %s82, %s84
      %p91 = scmp.eq.s32.totalorder %s27, 1
      %p92 = por %p90, %p91
      %p93 = scmp.ne.s32.totalorder %s84, %s85
      %p94 = scmp.eq.s32.totalorder %s27, 0
      %p95 = por %p93, %p94
      %p96 = scmp.ne.s32.totalorder %s84, %s85
      %p97 = scmp.eq.s32.totalorder %s28, 1
      %p98 = por %p96, %p97
      %p100 = scmp.ne.s32.totalorder %s85, %s99
      %p101 = scmp.eq.s32.totalorder %s28, 0
      %p102 = por %p100, %p101
      %s104 = sadd.s32 %s103, 1
      %p107 = scmp.eq.s32.totalorder %s22, 1
      %p108 = scmp.ne.s32.totalorder %s103, %s105
      %p109 = scmp.eq.s32.totalorder %s22, 0
      %p110 = por %p108, %p109
      %p111 = scmp.ne.s32.totalorder %s103, %s105
      %p112 = scmp.eq.s32.totalorder %s27, 1
      %p113 = por %p111, %p112
      %p114 = scmp.ne.s32.totalorder %s105, %s106
      %p115 = scmp.eq.s32.totalorder %s27, 0
      %p116 = por %p114, %p115
      %p117 = scmp.ne.s32.totalorder %s105, %s106
      %p118 = scmp.eq.s32.totalorder %s28, 1
      %p119 = por %p117, %p118
      %p121 = scmp.ne.s32.totalorder %s106, %s120
      %p122 = scmp.eq.s32.totalorder %s28, 0
      %p123 = por %p121, %p122
      %s125 = sadd.s32 %s124, 1
      %p128 = scmp.eq.s32.totalorder %s22, 1
      %p129 = scmp.ne.s32.totalorder %s124, %s126
      %p130 = scmp.eq.s32.totalorder %s22, 0
      %p131 = por %p129, %p130
      %p132 = scmp.ne.s32.totalorder %s124, %s126
      %p133 = scmp.eq.s32.totalorder %s27, 1
      %p134 = por %p132, %p133
      %p135 = scmp.ne.s32.totalorder %s126, %s127
      %p136 = scmp.eq.s32.totalorder %s27, 0
      %p137 = por %p135, %p136
      %p138 = scmp.ne.s32.totalorder %s126, %s127
      %p139 = scmp.eq.s32.totalorder %s28, 1
      %p140 = por %p138, %p139
      %p142 = scmp.ne.s32.totalorder %s127, %s141
      %p143 = scmp.eq.s32.totalorder %s28, 0
      %p144 = por %p142, %p143
      %s146 = sadd.s32 %s145, 1
      %p149 = scmp.eq.s32.totalorder %s22, 1
      %p150 = scmp.ne.s32.totalorder %s145, %s147
      %p151 = scmp.eq.s32.totalorder %s22, 0
      %p152 = por %p150, %p151
      %p153 = scmp.ne.s32.totalorder %s145, %s147
      %p154 = scmp.eq.s32.totalorder %s27, 1
      %p155 = por %p153, %p154
      %p156 = scmp.ne.s32.totalorder %s147, %s148
      %p157 = scmp.eq.s32.totalorder %s27, 0
      %p158 = por %p156, %p157
      %p159 = scmp.ne.s32.totalorder %s147, %s148
      %p160 = scmp.eq.s32.totalorder %s28, 1
      %p161 = por %p159, %p160
      %p163 = scmp.ne.s32.totalorder %s148, %s162
      %p164 = scmp.eq.s32.totalorder %s28, 0
      %p165 = por %p163, %p164
      %s167 = sadd.s32 %s166, 1
      %p170 = scmp.eq.s32.totalorder %s22, 1
      %p171 = scmp.ne.s32.totalorder %s166, %s168
      %p172 = scmp.eq.s32.totalorder %s22, 0
      %p173 = por %p171, %p172
      %p174 = scmp.ne.s32.totalorder %s166, %s168
      %p175 = scmp.eq.s32.totalorder %s27, 1
      %p176 = por %p174, %p175
      %p177 = scmp.ne.s32.totalorder %s168, %s169
      %p178 = scmp.eq.s32.totalorder %s27, 0
      %p179 = por %p177, %p178
      %p180 = scmp.ne.s32.totalorder %s168, %s169
      %p181 = scmp.eq.s32.totalorder %s28, 1
      %p182 = por %p180, %p181
      %p184 = scmp.ne.s32.totalorder %s169, %s183
      %p185 = scmp.eq.s32.totalorder %s28, 0
      %p186 = por %p184, %p185
      %s188 = sadd.s32 %s187, 1
      %p191 = scmp.eq.s32.totalorder %s22, 1
      %p192 = scmp.ne.s32.totalorder %s187, %s189
      %p193 = scmp.eq.s32.totalorder %s22, 0
      %p194 = por %p192, %p193
      %p195 = scmp.ne.s32.totalorder %s187, %s189
      %p196 = scmp.eq.s32.totalorder %s27, 1
      %p197 = por %p195, %p196
      %p198 = scmp.ne.s32.totalorder %s189, %s190
      %p199 = scmp.eq.s32.totalorder %s27, 0
      %p200 = por %p198, %p199
      %p201 = scmp.ne.s32.totalorder %s189, %s190
      %p202 = scmp.eq.s32.totalorder %s28, 1
      %p203 = por %p201, %p202
      %p205 = scmp.ne.s32.totalorder %s190, %s204
      %p206 = scmp.eq.s32.totalorder %s28, 0
      %p207 = por %p205, %p206
      %s209 = sadd.s32 %s208, 1
      %p212 = scmp.eq.s32.totalorder %s22, 1
      %p213 = scmp.ne.s32.totalorder %s208, %s210
      %p214 = scmp.eq.s32.totalorder %s22, 0
      %p215 = por %p213, %p214
      %p216 = scmp.ne.s32.totalorder %s208, %s210
      %p217 = scmp.eq.s32.totalorder %s27, 1
      %p218 = por %p216, %p217
      %p219 = scmp.ne.s32.totalorder %s210, %s211
      %p220 = scmp.eq.s32.totalorder %s27, 0
      %p221 = por %p219, %p220
      %p222 = scmp.ne.s32.totalorder %s210, %s211
      %p223 = scmp.eq.s32.totalorder %s28, 1
      %p224 = por %p222, %p223
      %p226 = scmp.ne.s32.totalorder %s211, %s225
      %p227 = scmp.eq.s32.totalorder %s28, 0
      %p228 = por %p226, %p227
      %s230 = sadd.s32 %s229, 1
      %p233 = scmp.eq.s32.totalorder %s22, 1
      %p234 = scmp.ne.s32.totalorder %s229, %s231
      %p235 = scmp.eq.s32.totalorder %s22, 0
      %p236 = por %p234, %p235
      %p237 = scmp.ne.s32.totalorder %s229, %s231
      %p238 = scmp.eq.s32.totalorder %s27, 1
      %p239 = por %p237, %p238
      %p240 = scmp.ne.s32.totalorder %s231, %s232
      %p241 = scmp.eq.s32.totalorder %s27, 0
      %p242 = por %p240, %p241
      %p243 = scmp.ne.s32.totalorder %s231, %s232
      %p244 = scmp.eq.s32.totalorder %s28, 1
      %p245 = por %p243, %p244
      %p247 = scmp.ne.s32.totalorder %s232, %s246
      %p248 = scmp.eq.s32.totalorder %s28, 0
      %p249 = por %p247, %p248
      %s251 = sadd.s32 %s250, 1
      %p254 = scmp.eq.s32.totalorder %s22, 1
      %p255 = scmp.ne.s32.totalorder %s250, %s252
      %p256 = scmp.eq.s32.totalorder %s22, 0
      %p257 = por %p255, %p256
      %p258 = scmp.ne.s32.totalorder %s250, %s252
      %p259 = scmp.eq.s32.totalorder %s27, 1
      %p260 = por %p258, %p259
      %p261 = scmp.ne.s32.totalorder %s252, %s253
      %p262 = scmp.eq.s32.totalorder %s27, 0
      %p263 = por %p261, %p262
      %p264 = scmp.ne.s32.totalorder %s252, %s253
      %p265 = scmp.eq.s32.totalorder %s28, 1
      %p266 = por %p264, %p265
      %p268 = scmp.ne.s32.totalorder %s253, %s267
      %p269 = scmp.eq.s32.totalorder %s28, 0
      %p270 = por %p268, %p269
      %s272 = sadd.s32 %s271, 1
      %p275 = scmp.eq.s32.totalorder %s22, 1
      %p276 = scmp.ne.s32.totalorder %s271, %s273
      %p277 = scmp.eq.s32.totalorder %s22, 0
      %p278 = por %p276, %p277
      %p279 = scmp.ne.s32.totalorder %s271, %s273
      %p280 = scmp.eq.s32.totalorder %s27, 1
      %p281 = por %p279, %p280
      %p282 = scmp.ne.s32.totalorder %s273, %s274
      %p283 = scmp.eq.s32.totalorder %s27, 0
      %p284 = por %p282, %p283
      %p285 = scmp.ne.s32.totalorder %s273, %s274
      %p286 = scmp.eq.s32.totalorder %s28, 1
      %p287 = por %p285, %p286
      %p289 = scmp.ne.s32.totalorder %s274, %s288
      %p290 = scmp.eq.s32.totalorder %s28, 0
      %p291 = por %p289, %p290
      %s293 = sadd.s32 %s292, 1
      %p296 = scmp.eq.s32.totalorder %s22, 1
      %p297 = scmp.ne.s32.totalorder %s292, %s294
      %p298 = scmp.eq.s32.totalorder %s22, 0
      %p299 = por %p297, %p298
      %p300 = scmp.ne.s32.totalorder %s292, %s294
      %p301 = scmp.eq.s32.totalorder %s27, 1
      %p302 = por %p300, %p301
      %p303 = scmp.ne.s32.totalorder %s294, %s295
      %p304 = scmp.eq.s32.totalorder %s27, 0
      %p305 = por %p303, %p304
      %p306 = scmp.ne.s32.totalorder %s294, %s295
      %p307 = scmp.eq.s32.totalorder %s28, 1
      %p308 = por %p306, %p307
      %p310 = scmp.ne.s32.totalorder %s295, %s309
      %p311 = scmp.eq.s32.totalorder %s28, 0
      %p312 = por %p310, %p311
      %s314 = sadd.s32 %s313, 1
      %p317 = scmp.eq.s32.totalorder %s22, 1
      %p318 = scmp.ne.s32.totalorder %s313, %s315
      %p319 = scmp.eq.s32.totalorder %s22, 0
      %p320 = por %p318, %p319
      %p321 = scmp.ne.s32.totalorder %s313, %s315
      %p322 = scmp.eq.s32.totalorder %s27, 1
      %p323 = por %p321, %p322
      %p324 = scmp.ne.s32.totalorder %s315, %s316
      %p325 = scmp.eq.s32.totalorder %s27, 0
      %p326 = por %p324, %p325
      %p327 = scmp.ne.s32.totalorder %s315, %s316
      %p328 = scmp.eq.s32.totalorder %s28, 1
      %p329 = por %p327, %p328
      %p331 = scmp.ne.s32.totalorder %s316, %s330
      %p332 = scmp.eq.s32.totalorder %s28, 0
      %p333 = por %p331, %p332
      %s334 = ssub.s32 %s22, %s29
      %p335 = scmp.eq.s32.totalorder %s334, 0
      %s337 = sadd.s32 %s336, 1
      %s338 = scalar_select %p335, %s336, %s337
      %p341 = pneg %p335
      %p342 = scmp.eq.s32.totalorder %s22, 1
      %p343 = por %p341, %p342
      %p344 = scmp.ne.s32.totalorder %s336, %s339
      %p345 = scmp.eq.s32.totalorder %s22, 0
      %p346 = por %p344, %p345
      %p347 = scmp.ne.s32.totalorder %s336, %s339
      %p348 = scmp.eq.s32.totalorder %s27, 1
      %p349 = por %p347, %p348
      %p350 = scmp.ne.s32.totalorder %s339, %s340
      %p351 = scmp.eq.s32.totalorder %s27, 0
      %p352 = por %p350, %p351
      %p353 = scmp.ne.s32.totalorder %s339, %s340
      %p354 = scmp.eq.s32.totalorder %s28, 1
      %p355 = por %p353, %p354
      %p357 = scmp.ne.s32.totalorder %s340, %s356
      %p358 = scmp.eq.s32.totalorder %s28, 0
      %p359 = por %p357, %p358
      %p360 = scmp.le.s32.totalorder 1, %s22
      %p361 = scmp.lt.s32.totalorder %s22, 3
      %p362 = pnand %p360, %p361
      %p363 = pneg %p362
      // Predicated region
      $region9: #{chembert_forward.5} parent=5 // pred_check
        _
      $region10: #{chembert_forward.5} parent=5 // pred_check_branch
        %365 = sbr.rel (%p362) target = $region12
      $region11: #{chembert_forward.5} parent=5 // pred_region
        %s366 = ssub.s32 %s22, 1
        // Predicated region
        $region13: #{chembert_forward.5} parent=11 // pred_check
          %p367 = pneg %p95
        $region14: #{chembert_forward.5} parent=11 // pred_check_branch
          %369 = sbr.rel (%p367) target = $region16
        $region15: #{chembert_forward.5} parent=11 // pred_region
          _
        $region16: #{chembert_forward.5} parent=11 // pred_fallthru
          _
        // Predicated region
        $region17: #{chembert_forward.5} parent=11 // pred_check
          %p370 = pneg %p116
        $region18: #{chembert_forward.5} parent=11 // pred_check_branch
          %372 = sbr.rel (%p370) target = $region20
        $region19: #{chembert_forward.5} parent=11 // pred_region
          _
        $region20: #{chembert_forward.5} parent=11 // pred_fallthru
          _
        // Predicated region
        $region21: #{chembert_forward.5} parent=11 // pred_check
          %p373 = pneg %p137
        $region22: #{chembert_forward.5} parent=11 // pred_check_branch
          %375 = sbr.rel (%p373) target = $region24
        $region23: #{chembert_forward.5} parent=11 // pred_region
          %377 = vsyncadd [#allocation3], 0
          %s378 = sshll.u32 %s4, 4
          %s379 = int_to_ptr.hbm [resolvable:$true] %s378
          %s380 = sshll.u32 [#allocation2], 4
          %s381 = int_to_ptr.vmem [resolvable:$true] %s380
          %386 = dma.hbm_to_vmem [thread:$0]  %s379, 256, %s381, [#allocation3], 64, 64, 4
        $region24: #{chembert_forward.5} parent=11 // pred_fallthru
          _
        // Predicated region
        $region25: #{chembert_forward.5} parent=11 // pred_check
          %p387 = pneg %p158
        $region26: #{chembert_forward.5} parent=11 // pred_check_branch
          %389 = sbr.rel (%p387) target = $region28
        $region27: #{chembert_forward.5} parent=11 // pred_region
          _
        $region28: #{chembert_forward.5} parent=11 // pred_fallthru
          _
        // Predicated region
        $region29: #{chembert_forward.5} parent=11 // pred_check
          %p390 = pneg %p179
        $region30: #{chembert_forward.5} parent=11 // pred_check_branch
          %392 = sbr.rel (%p390) target = $region32
        $region31: #{chembert_forward.5} parent=11 // pred_region
          _
        $region32: #{chembert_forward.5} parent=11 // pred_fallthru
          _
        // Predicated region
        $region33: #{chembert_forward.5} parent=11 // pred_check
          %p393 = pneg %p200
        $region34: #{chembert_forward.5} parent=11 // pred_check_branch
          %395 = sbr.rel (%p393) target = $region36
        $region35: #{chembert_forward.5} parent=11 // pred_region
          _
        $region36: #{chembert_forward.5} parent=11 // pred_fallthru
          _
        // Predicated region
        $region37: #{chembert_forward.5} parent=11 // pred_check
          %p396 = pneg %p221
        $region38: #{chembert_forward.5} parent=11 // pred_check_branch
          %398 = sbr.rel (%p396) target = $region40
        $region39: #{chembert_forward.5} parent=11 // pred_region
          %400 = vsyncadd [#allocation5], 0
          %s401 = sshll.u32 %s8, 4
          %s402 = int_to_ptr.hbm [resolvable:$true] %s401
          %s403 = sshll.u32 [#allocation4], 4
          %s404 = int_to_ptr.vmem [resolvable:$true] %s403
          %409 = dma.hbm_to_vmem [thread:$0]  %s402, 256, %s404, [#allocation5], 64, 64, 4
        $region40: #{chembert_forward.5} parent=11 // pred_fallthru
          _
        // Predicated region
        $region41: #{chembert_forward.5} parent=11 // pred_check
          %p410 = pneg %p242
        $region42: #{chembert_forward.5} parent=11 // pred_check_branch
          %412 = sbr.rel (%p410) target = $region44
        $region43: #{chembert_forward.5} parent=11 // pred_region
          _
        $region44: #{chembert_forward.5} parent=11 // pred_fallthru
          _
        // Predicated region
        $region45: #{chembert_forward.5} parent=11 // pred_check
          %p413 = pneg %p263
        $region46: #{chembert_forward.5} parent=11 // pred_check_branch
          %415 = sbr.rel (%p413) target = $region48
        $region47: #{chembert_forward.5} parent=11 // pred_region
          _
        $region48: #{chembert_forward.5} parent=11 // pred_fallthru
          _
        // Predicated region
        $region49: #{chembert_forward.5} parent=11 // pred_check
          %p416 = pneg %p284
        $region50: #{chembert_forward.5} parent=11 // pred_check_branch
          %418 = sbr.rel (%p416) target = $region52
        $region51: #{chembert_forward.5} parent=11 // pred_region
          _
        $region52: #{chembert_forward.5} parent=11 // pred_fallthru
          _
        // Predicated region
        $region53: #{chembert_forward.5} parent=11 // pred_check
          %p419 = pneg %p305
        $region54: #{chembert_forward.5} parent=11 // pred_check_branch
          %421 = sbr.rel (%p419) target = $region56
        $region55: #{chembert_forward.5} parent=11 // pred_region
          _
        $region56: #{chembert_forward.5} parent=11 // pred_fallthru
          _
        // Predicated region
        $region57: #{chembert_forward.5} parent=11 // pred_check
          %p422 = pneg %p326
        $region58: #{chembert_forward.5} parent=11 // pred_check_branch
          %424 = sbr.rel (%p422) target = $region60
        $region59: #{chembert_forward.5} parent=11 // pred_region
          _
        $region60: #{chembert_forward.5} parent=11 // pred_fallthru
          _
      $region12: #{chembert_forward.5} parent=5 // pred_fallthru
        _
      %p425 = scmp.lt.s32.totalorder %s22, 2
      // Predicated region
      $region61: #{chembert_forward.5} parent=5 // pred_check
        %p426 = pneg %p425
      $region62: #{chembert_forward.5} parent=5 // pred_check_branch
        %428 = sbr.rel (%p426) target = $region64
      $region63: #{chembert_forward.5} parent=5 // pred_region
        // Predicated region
        $region65: #{chembert_forward.5} parent=63 // pred_check
          %p429 = pneg %p42
        $region66: #{chembert_forward.5} parent=63 // pred_check_branch
          %431 = sbr.rel (%p429) target = $region68
        $region67: #{chembert_forward.5} parent=63 // pred_region
          %p432 = scmp.lt.s32.totalorder %s22, 1
          %s433 = scalar_select %p432, %s22, 1
          %s434 = smul.addr %s433, 8
          %s435 = scalar_lea.vmem %s0, %s434
        $region68: #{chembert_forward.5} parent=63 // pred_fallthru
          _
        // Predicated region
        $region69: #{chembert_forward.5} parent=63 // pred_check
          %p436 = pneg %p68
        $region70: #{chembert_forward.5} parent=63 // pred_check_branch
          %438 = sbr.rel (%p436) target = $region72
        $region71: #{chembert_forward.5} parent=63 // pred_region
          %p439 = scmp.lt.s32.totalorder %s22, 1
          %s440 = scalar_select %p439, %s22, 1
          %s441 = scalar_lea.vmem %s1, %s440
        $region72: #{chembert_forward.5} parent=63 // pred_fallthru
          _
      $region64: #{chembert_forward.5} parent=5 // pred_fallthru
        _
      %p442 = scmp.le.s32.totalorder 1, %s22
      %p443 = scmp.lt.s32.totalorder %s22, 3
      %p444 = pnand %p442, %p443
      %p445 = pneg %p444
      // Predicated region
      $region73: #{chembert_forward.5} parent=5 // pred_check
        _
      $region74: #{chembert_forward.5} parent=5 // pred_check_branch
        %447 = sbr.rel (%p444) target = $region76
      $region75: #{chembert_forward.5} parent=5 // pred_region
        %s448 = ssub.s32 %s22, 1
        // Predicated region
        $region77: #{chembert_forward.5} parent=75 // pred_check
          %p449 = pneg %p137
        $region78: #{chembert_forward.5} parent=75 // pred_check_branch
          %451 = sbr.rel (%p449) target = $region80
        $region79: #{chembert_forward.5} parent=75 // pred_region
          %453 = dma.done [#allocation3], 256
        $region80: #{chembert_forward.5} parent=75 // pred_fallthru
          _
        // Predicated region
        $region81: #{chembert_forward.5} parent=75 // pred_check
          %p454 = pneg %p221
        $region82: #{chembert_forward.5} parent=75 // pred_check_branch
          %456 = sbr.rel (%p454) target = $region84
        $region83: #{chembert_forward.5} parent=75 // pred_region
          %458 = dma.done [#allocation5], 256
        $region84: #{chembert_forward.5} parent=75 // pred_fallthru
          _
        %p459 = scmp.lt.s32.totalorder %s27, 1
        %s460 = scalar_select %p459, %s27, 1
        %s461 = smul.addr %s460, 8
        %s462 = scalar_lea.vmem %s0, %s461
        %p463 = pneg %p48
        %p464 = pneg %p45
        %p465 = scmp.lt.s32.totalorder %s27, 1
        %s466 = scalar_select %p465, %s27, 1
        %s467 = scalar_lea.vmem %s1, %s466
        %p468 = pneg %p74
        %p469 = pneg %p71
        %p470 = pneg %p95
        %p471 = pneg %p92
        %p472 = pneg %p116
        %p473 = pneg %p113
        %p474 = pneg %p137
        %p475 = pneg %p134
        %p476 = pneg %p158
        %p477 = pneg %p155
        %p478 = pneg %p179
        %p479 = pneg %p176
        %p480 = pneg %p200
        %p481 = pneg %p197
        %p482 = pneg %p221
        %p483 = pneg %p218
        %p484 = pneg %p242
        %p485 = pneg %p239
        %p486 = pneg %p263
        %p487 = pneg %p260
        %p488 = pneg %p284
        %p489 = pneg %p281
        %p490 = pneg %p305
        %p491 = pneg %p302
        %p492 = pneg %p326
        %p493 = pneg %p323
        %p494 = pneg %p352
        %p495 = pneg %p349
        %p496 = scmp.lt.s32.totalorder %s27, 1
        %s497 = scalar_select %p496, %s27, 1
        %s498 = smul.addr %s497, 8
        %s499 = scalar_lea.vmem %s14, %s498
        %p500 = scmp.lt.s32.totalorder %s27, 1
        %s501 = scalar_select %p500, %s27, 1
        %s502 = smul.addr %s501, 8
        %s503 = scalar_lea.vmem %s0, %s502
        %p504 = scmp.lt.s32.totalorder %s27, 1
        %s505 = scalar_select %p504, %s27, 1
        %s506 = scalar_lea.vmem %s1, %s505
        %p507 = scmp.lt.s32.totalorder %s27, 1
        %s508 = scalar_select %p507, %s27, 1
        %s509 = smul.addr %s508, 8
        %s510 = scalar_lea.vmem %s14, %s509
        %v512 = vld [vmem:[%s503] sm:$0xff]
        %v513 = vld [vmem:[%s506] sm:$0x1]
        %v514 = vld [vmem:[%s2] sm:$0xf]
        %v515 = vld [vmem:[%s2 + $0x4] sm:$0xf]
        %v516 = vld [vmem:[%s2 + $0x8] sm:$0xf]
        %v517 = vld [vmem:[%s2 + $0xc] sm:$0xf]
        %v518 = vpack.c.bf16 %v512, %v512
        %v519 = vld [vmem:[%s3] sm:$0x1]
        %v521 = vperm.slane %v519, 0
        %v527 = vunpack.c.l.b16 %v514
        %v528 = vunpack.c.l.b16 %v515
        %v529 = vunpack.c.l.b16 %v516
        %v530 = vunpack.c.l.b16 %v517
        %v531 = vpack.c.b16 %v528, %v527
        %v532 = vpack.c.b16 %v530, %v529
        %vm535 = vcmask 261120
        %v537 = vsel %vm535, %v518, 0
        %539 = vmatpush.bf16.msra.mxu0 0
        %540 = vmatpush.bf16.msra.mxu0 0
        %541 = vmatpush.bf16.msra.mxu0 0
        %542 = vmatpush.bf16.msra.mxu0 0
        %543 = vmatpush.bf16.msra.mxu0 0
        %544 = vmatpush.bf16.msra.mxu0 0
        %545 = vmatpush.bf16.msra.mxu0 %v532
        %546 = vmatpush.bf16.msra.mxu0 %v531
        %547 = vmatmul.bf16.gmra.mxu0 %v537
        %v548 = vpop.f32.mrf.mxu0
        %v549 = vadd.f32 %v521, %v548
        %v550 = vpop.f32.mrf.mxu0
        %551 = vdwg.mxu0
        %v552 = vld [vmem:[#allocation2] sm:$0xf]
        %v553 = vld [vmem:[#allocation2 + $0x4] sm:$0xf]
        %v554 = vld [vmem:[#allocation2 + $0x8] sm:$0xf]
        %v555 = vld [vmem:[#allocation2 + $0xc] sm:$0xf]
        %v556 = vld [vmem:[%s5] sm:$0x1]
        %v557 = vpack.c.bf16 %v549, %v549
        %559 = vrot.lane.b32.xlu0 %v557, 96
        %v560 = vpop.permute.xlu0 %559
        %vm561 = vcmask 130048
        %v563 = vsel %vm561, %v557, 0
        %v566 = vsel %vm561, %v560, 0
        %568 = vmatpush.bf16.xpose.msra.mxu0 0
        %569 = vmatpush.bf16.xpose.msra.mxu0 0
        %570 = vmatpush.bf16.xpose.msra.mxu0 0
        %571 = vmatpush.bf16.xpose.msra.mxu0 0
        %572 = vmatpush.bf16.xpose.msra.mxu0 0
        %573 = vmatpush.bf16.xpose.msra.mxu0 0
        %574 = vmatpush.bf16.xpose.msra.mxu0 0
        %575 = vmatpush.bf16.xpose.msra.mxu0 %v566
        %576 = vmatmul.bf16.gmra.mxu0 %v563
        %v577 = vpop.f32.mrf.mxu0
        %v578 = vadd.f32 0.0, %v577
        %v579 = vpop.f32.mrf.mxu0
        %580 = vdwg.mxu0
        %v581 = vmul.f32 %v578, 0.25
        %v583 = vperm.slane %v513, 0
        %v585 = vadd.f32 %v581, %v583
        %vm586 = vcmask 64512
        %v587 = vsel %vm586, %v585, -inf
        %588 = vmax.xlane.f32.xlu0 %v587
        %v589 = vpop.xlane.xlu0 %588
        %v590 = vsub.f32 %v585, %v589
        %v591 = vmul.f32 %v590, 1.442695
        %v592 = vpow.pop %v591
        %v593 = vsel %vm586, %v592, 0.0
        %594 = vadd.xlane.f32.xlu0 %v593
        %v595 = vpop.xlane.xlu0 %594
        %v596 = vrcp.pop %v595
        %v597 = vmul.f32 %v592, %v596
        %v598 = vpack.c.bf16 %v597, %v597
        %599 = vrot.lane.b32.xlu0 %v557, 64
        %v600 = vpop.permute.xlu0 %599
        %v602 = vsel %vm586, %v598, 0
        %vm604 = vcmask 1043456
        %v606 = vsel %vm604, %v600, 0
        %608 = vmatpush.bf16.msra.mxu0 0
        %609 = vmatpush.bf16.msra.mxu0 0
        %610 = vmatpush.bf16.msra.mxu0 0
        %611 = vmatpush.bf16.msra.mxu0 0
        %612 = vmatpush.bf16.msra.mxu0 0
        %613 = vmatpush.bf16.msra.mxu0 0
        %614 = vmatpush.bf16.msra.mxu0 0
        %615 = vmatpush.bf16.msra.mxu0 %v606
        %616 = vmatmul.bf16.gmra.mxu0 %v602
        %v617 = vpop.f32.mrf.mxu0
        %v618 = vadd.f32 0.0, %v617
        %v619 = vpop.f32.mrf.mxu0
        %620 = vdwg.mxu0
        %v621 = vpack.c.bf16 %v618, %v618
        %v624 = vunpack.c.l.b16 %v552
        %v625 = vunpack.c.l.b16 %v553
        %v626 = vpack.c.b16 %v625, %v624
        %v629 = vsel %vm561, %v621, 0
        %631 = vmatpush.bf16.msra.mxu0 0
        %632 = vmatpush.bf16.msra.mxu0 0
        %633 = vmatpush.bf16.msra.mxu0 0
        %634 = vmatpush.bf16.msra.mxu0 0
        %635 = vmatpush.bf16.msra.mxu0 0
        %636 = vmatpush.bf16.msra.mxu0 0
        %637 = vmatpush.bf16.msra.mxu0 0
        %638 = vmatpush.bf16.msra.mxu0 %v626
        %639 = vmatmul.bf16.gmra.mxu0 %v629
        %v640 = vpop.f32.mrf.mxu0
        %v641 = vadd.f32 0.0, %v640
        %v642 = vpop.f32.mrf.mxu0
        %643 = vdwg.mxu0
        %v645 = vperm.slane %v556, 0
        %v647 = vadd.f32 %v645, %v641
        %648 = vrot.lane.b32.xlu0 %v557, 112
        %v649 = vpop.permute.xlu0 %648
        %650 = vrot.lane.b32.xlu0 %v557, 80
        %v651 = vpop.permute.xlu0 %650
        %v653 = vsel %vm561, %v649, 0
        %v656 = vsel %vm561, %v651, 0
        %658 = vmatpush.bf16.xpose.msra.mxu0 0
        %659 = vmatpush.bf16.xpose.msra.mxu0 0
        %660 = vmatpush.bf16.xpose.msra.mxu0 0
        %661 = vmatpush.bf16.xpose.msra.mxu0 0
        %662 = vmatpush.bf16.xpose.msra.mxu0 0
        %663 = vmatpush.bf16.xpose.msra.mxu0 0
        %664 = vmatpush.bf16.xpose.msra.mxu0 0
        %665 = vmatpush.bf16.xpose.msra.mxu0 %v656
        %666 = vmatmul.bf16.gmra.mxu0 %v653
        %v667 = vpop.f32.mrf.mxu0
        %v668 = vadd.f32 0.0, %v667
        %v669 = vpop.f32.mrf.mxu0
        %670 = vdwg.mxu0
        %v671 = vmul.f32 %v668, 0.25
        %v672 = vadd.f32 %v671, %v583
        %v673 = vsel %vm586, %v672, -inf
        %674 = vmax.xlane.f32.xlu0 %v673
        %v675 = vpop.xlane.xlu0 %674
        %v676 = vsub.f32 %v672, %v675
        %v677 = vmul.f32 %v676, 1.442695
        %v678 = vpow.pop %v677
        %v679 = vsel %vm586, %v678, 0.0
        %680 = vadd.xlane.f32.xlu0 %v679
        %v681 = vpop.xlane.xlu0 %680
        %v682 = vrcp.pop %v681
        %v683 = vmul.f32 %v678, %v682
        %v684 = vpack.c.bf16 %v683, %v683
        %685 = vrot.lane.b32.xlu0 %v557, 48
        %v686 = vpop.permute.xlu0 %685
        %v688 = vsel %vm586, %v684, 0
        %v691 = vsel %vm604, %v686, 0
        %693 = vmatpush.bf16.msra.mxu0 0
        %694 = vmatpush.bf16.msra.mxu0 0
        %695 = vmatpush.bf16.msra.mxu0 0
        %696 = vmatpush.bf16.msra.mxu0 0
        %697 = vmatpush.bf16.msra.mxu0 0
        %698 = vmatpush.bf16.msra.mxu0 0
        %699 = vmatpush.bf16.msra.mxu0 0
        %700 = vmatpush.bf16.msra.mxu0 %v691
        %701 = vmatmul.bf16.gmra.mxu0 %v688
        %v702 = vpop.f32.mrf.mxu0
        %v703 = vadd.f32 0.0, %v702
        %v704 = vpop.f32.mrf.mxu0
        %705 = vdwg.mxu0
        %v706 = vpack.c.bf16 %v703, %v703
        %v709 = vunpack.c.l.b16 %v554
        %v710 = vunpack.c.l.b16 %v555
        %v711 = vpack.c.b16 %v710, %v709
        %v714 = vsel %vm561, %v706, 0
        %716 = vmatpush.bf16.msra.mxu0 0
        %717 = vmatpush.bf16.msra.mxu0 0
        %718 = vmatpush.bf16.msra.mxu0 0
        %719 = vmatpush.bf16.msra.mxu0 0
        %720 = vmatpush.bf16.msra.mxu0 0
        %721 = vmatpush.bf16.msra.mxu0 0
        %722 = vmatpush.bf16.msra.mxu0 0
        %723 = vmatpush.bf16.msra.mxu0 %v711
        %724 = vmatmul.bf16.gmra.mxu0 %v714
        %v725 = vpop.f32.mrf.mxu0
        %v726 = vadd.f32 0.0, %v725
        %v727 = vpop.f32.mrf.mxu0
        %728 = vdwg.mxu0
        %v729 = vadd.f32 %v647, %v726
        %v730 = vadd.f32 %v729, %v512
        %v731 = vld [vmem:[%s6] sm:$0x1]
        %v732 = vld [vmem:[%s7] sm:$0x1]
        %v733 = vsel %vm535, %v730, 0.0
        %734 = vadd.xlane.f32.xlu0 %v733
        %v735 = vpop.xlane.xlu0 %734
        %v736 = vrcp.pop 32.0
        %v737 = vmul.f32 32.0, %v736
        %v738 = vsub.f32 1.0, %v737
        %v739 = vmul.f32 %v736, %v738
        %v740 = vadd.f32 %v736, %v739
        %vm741 = vweird.f32 %v736
        %v742 = vsel %vm741, %v736, %v740
        %v743 = vmul.f32 %v735, %v742
        %v744 = vsub.f32 %v730, %v743
        %v745 = vmul.f32 %v744, %v744
        %v746 = vsel %vm535, %v745, 0.0
        %747 = vadd.xlane.f32.xlu0 %v746
        %v748 = vpop.xlane.xlu0 %747
        %v749 = vmul.f32 %v748, %v742
        %v750 = vadd.f32 %v749, 1e-05
        %v751 = vrsqrt.pop %v750
        %v752 = vmul.f32 %v751, %v750
        %v753 = vmul.f32 %v752, %v751
        %v754 = vmul.f32 0.5, %v753
        %v755 = vsub.f32 1.5, %v754
        %v756 = vmul.f32 %v751, %v755
        %vm757 = vweird.f32 %v750
        %vm758 = vweird.f32 %v751
        %vm759 = vmor %vm757, %vm758
        %v760 = vsel %vm759, %v751, %v756
        %v761 = vmul.f32 %v744, %v760
        %v763 = vperm.slane %v731, 0
        %v765 = vmul.f32 %v761, %v763
        %v767 = vperm.slane %v732, 0
        %v769 = vadd.f32 %v765, %v767
        %v770 = vld [vmem:[#allocation4] sm:$0xf]
        %v771 = vld [vmem:[#allocation4 + $0x4] sm:$0xf]
        %v772 = vld [vmem:[#allocation4 + $0x8] sm:$0xf]
        %v773 = vld [vmem:[#allocation4 + $0xc] sm:$0xf]
        %v774 = vpack.c.bf16 %v769, %v769
        %v775 = vld [vmem:[%s9] sm:$0x1]
        %v777 = vperm.slane %v775, 0
        %v783 = vunpack.c.l.b16 %v770
        %v784 = vunpack.c.l.b16 %v771
        %v785 = vunpack.c.l.b16 %v772
        %v786 = vunpack.c.l.b16 %v773
        %v787 = vpack.c.b16 %v784, %v783
        %v788 = vpack.c.b16 %v786, %v785
        %v792 = vsel %vm535, %v774, 0
        %794 = vmatpush.bf16.msra.mxu0 0
        %795 = vmatpush.bf16.msra.mxu0 0
        %796 = vmatpush.bf16.msra.mxu0 0
        %797 = vmatpush.bf16.msra.mxu0 0
        %798 = vmatpush.bf16.msra.mxu0 0
        %799 = vmatpush.bf16.msra.mxu0 0
        %800 = vmatpush.bf16.msra.mxu0 %v788
        %801 = vmatpush.bf16.msra.mxu0 %v787
        %802 = vmatmul.bf16.gmra.mxu0 %v792
        %v803 = vpop.f32.mrf.mxu0
        %v804 = vadd.f32 %v777, %v803
        %v805 = vpop.f32.mrf.mxu0
        %806 = vdwg.mxu0
        %v807 = vmul.f32 %v804, %v804
        %v808 = vmul.f32 %v804, %v807
        %v809 = vmul.f32 %v808, 0.044715
        %v810 = vadd.f32 %v804, %v809
        %v811 = vmul.f32 %v810, 0.7978846
        %v812 = vtanh.pop %v811
        %v813 = vadd.f32 %v812, 1.0
        %v814 = vmul.f32 %v813, 0.5
        %v815 = vmul.f32 %v804, %v814
        %v816 = vld [vmem:[%s10] sm:$0xf]
        %v817 = vld [vmem:[%s10 + $0x4] sm:$0xf]
        %v818 = vld [vmem:[%s10 + $0x8] sm:$0xf]
        %v819 = vld [vmem:[%s10 + $0xc] sm:$0xf]
        %v820 = vld [vmem:[%s10 + $0x10] sm:$0xf]
        %v821 = vld [vmem:[%s10 + $0x14] sm:$0xf]
        %v822 = vld [vmem:[%s10 + $0x18] sm:$0xf]
        %v823 = vld [vmem:[%s10 + $0x1c] sm:$0xf]
        %v824 = vpack.c.bf16 %v815, %v815
        %v825 = vld [vmem:[%s11] sm:$0x1]
        %v827 = vperm.slane %v825, 0
        %v837 = vunpack.c.l.b16 %v816
        %v838 = vunpack.c.l.b16 %v817
        %v839 = vunpack.c.l.b16 %v818
        %v840 = vunpack.c.l.b16 %v819
        %v841 = vunpack.c.l.b16 %v820
        %v842 = vunpack.c.l.b16 %v821
        %v843 = vunpack.c.l.b16 %v822
        %v844 = vunpack.c.l.b16 %v823
        %v845 = vpack.c.b16 %v838, %v837
        %v846 = vpack.c.b16 %v840, %v839
        %v847 = vpack.c.b16 %v842, %v841
        %v848 = vpack.c.b16 %v844, %v843
        %vm853 = vcmask 523264
        %v855 = vsel %vm853, %v824, 0
        %857 = vmatpush.bf16.msra.mxu0 0
        %858 = vmatpush.bf16.msra.mxu0 0
        %859 = vmatpush.bf16.msra.mxu0 0
        %860 = vmatpush.bf16.msra.mxu0 0
        %861 = vmatpush.bf16.msra.mxu0 %v848
        %862 = vmatpush.bf16.msra.mxu0 %v847
        %863 = vmatpush.bf16.msra.mxu0 %v846
        %864 = vmatpush.bf16.msra.mxu0 %v845
        %865 = vmatmul.bf16.gmra.mxu0 %v855
        %v866 = vpop.f32.mrf.mxu0
        %v867 = vadd.f32 %v827, %v866
        %v868 = vpop.f32.mrf.mxu0
        %869 = vdwg.mxu0
        %v870 = vadd.f32 %v867, %v769
        %v871 = vld [vmem:[%s12] sm:$0x1]
        %v872 = vld [vmem:[%s13] sm:$0x1]
        %v873 = vsel %vm535, %v870, 0.0
        %874 = vadd.xlane.f32.xlu0 %v873
        %v875 = vpop.xlane.xlu0 %874
        %v876 = vmul.f32 %v875, %v742
        %v877 = vsub.f32 %v870, %v876
        %v878 = vmul.f32 %v877, %v877
        %v879 = vsel %vm535, %v878, 0.0
        %880 = vadd.xlane.f32.xlu0 %v879
        %v881 = vpop.xlane.xlu0 %880
        %v882 = vmul.f32 %v881, %v742
        %v883 = vadd.f32 %v882, 1e-05
        %v884 = vrsqrt.pop %v883
        %v885 = vmul.f32 %v884, %v883
        %v886 = vmul.f32 %v885, %v884
        %v887 = vmul.f32 0.5, %v886
        %v888 = vsub.f32 1.5, %v887
        %v889 = vmul.f32 %v884, %v888
        %vm890 = vweird.f32 %v883
        %vm891 = vweird.f32 %v884
        %vm892 = vmor %vm890, %vm891
        %v893 = vsel %vm892, %v884, %v889
        %v894 = vmul.f32 %v877, %v893
        %v896 = vperm.slane %v871, 0
        %v898 = vmul.f32 %v894, %v896
        %v900 = vperm.slane %v872, 0
        %v902 = vadd.f32 %v898, %v900
        %903 = vst.msk [vmem:[%s510] sm:$0xff] %vm535, %v902
        %p904 = scmp.lt.s32.totalorder %s27, 1
        %s905 = scalar_select %p904, %s27, 1
        %s906 = smul.addr %s905, 8
        %s907 = scalar_lea.vmem %s14, %s906
        // Predicated region
        $region85: #{chembert_forward.5} parent=75 // pred_check
          %p908 = pneg %p349
        $region86: #{chembert_forward.5} parent=75 // pred_check_branch
          %910 = sbr.rel (%p908) target = $region88
        $region87: #{chembert_forward.5} parent=75 // pred_region
          _
        $region88: #{chembert_forward.5} parent=75 // pred_fallthru
          _
      $region76: #{chembert_forward.5} parent=5 // pred_fallthru
        _
      %p911 = scmp.le.s32.totalorder 2, %s22
      // Predicated region
      $region89: #{chembert_forward.5} parent=5 // pred_check
        %p912 = pneg %p911
      $region90: #{chembert_forward.5} parent=5 // pred_check_branch
        %914 = sbr.rel (%p912) target = $region92
      $region91: #{chembert_forward.5} parent=5 // pred_region
        %s915 = ssub.s32 %s22, 2
        // Predicated region
        $region93: #{chembert_forward.5} parent=91 // pred_check
          %p916 = pneg %p355
        $region94: #{chembert_forward.5} parent=91 // pred_check_branch
          %918 = sbr.rel (%p916) target = $region96
        $region95: #{chembert_forward.5} parent=91 // pred_region
          %p919 = scmp.lt.s32.totalorder %s28, 1
          %s920 = scalar_select %p919, %s28, 1
          %s921 = smul.addr %s920, 8
          %s922 = scalar_lea.vmem %s14, %s921
        $region96: #{chembert_forward.5} parent=91 // pred_fallthru
          _
      $region92: #{chembert_forward.5} parent=5 // pred_fallthru
        _
    $region6: #{chembert_forward.5} parent=1 // loop_footer
      %s26 = sadd.s32 1, %s22
    $region7: #{chembert_forward.5} parent=1 // loop_footer_branch
      %21 = sbr.rel target = $region3
    $region8: #{chembert_forward.5} parent=1 // loop_exit
      _
    %923 = vsyncpa [#allocation3], 1
    %s924 = scalar_lea.sflag [#allocation3], 1
    %925 = vsyncpa %s924, 1
    %926 = vsyncpa [#allocation5], 1

</llo_original>
